<compile_context>
chip_gen: v5e
topology: v5e:2x2
jax: 0.10.0
libtpu: 0.0.40
codegen_flags: <defaults>
</compile_context>

<pallas_src>
import math
from functools import partial

import jax
import jax.numpy as jnp
from jax.experimental import pallas as pl
from jax.experimental.pallas import tpu as pltpu

LANE = 128  # final-output lane padding (lane-dense store; sliced in wrapper)


# ----------------------------- in-kernel helpers -----------------------------

def _layer_norm(x, gamma, beta, eps=1e-5):
    mu = jnp.mean(x, axis=-1, keepdims=True)
    var = jnp.mean((x - mu) ** 2, axis=-1, keepdims=True)
    return (x - mu) * jax.lax.rsqrt(var + eps) * gamma + beta


def _gelu(x):
    # TODO(synk): nn.GELU() default is the exact erf form; tanh approximation
    # is used for Mosaic-safe lowering (sub-1e-4 error at these activation scales).
    c = math.sqrt(2.0 / math.pi)
    return 0.5 * x * (1.0 + jnp.tanh(c * (x + 0.044715 * x ** 3)))


# ------------------------------- fused kernel --------------------------------

def fused_forward_kernel(src_ref, mask_ref, emb_w_ref, pe_b_ref,
                         wqkv_ref, bqkv_ref, wo_ref, bo_ref,
                         ln1g_ref, ln1b_ref, w1_ref, b1_ref,
                         w2_ref, b2_ref, ln2g_ref, ln2b_ref,
                         fcw_ref, fcb_ref, o_ref, *, n_heads, n_layers):
    """One grid step = one batch element; residual stream x is (S, D)."""
    f32 = jnp.float32
    # Embedding + positional encoding (embedding bias pre-folded into pe_b).
    x = (jnp.dot(src_ref[...], emb_w_ref[...], preferred_element_type=f32)
         + pe_b_ref[...])                                  # (S, D)
    S, D = x.shape
    H = n_heads
    hd = D // H
    scale = 1.0 / math.sqrt(hd)
    mask = mask_ref[...]                                   # (S, S) additive causal
    ones_row = jnp.ones((H, 1, S), f32)                    # hoisted row-sum probe

    for l in range(n_layers):                              # static unroll
        # Fused QKV projection (one MXU push), transposed result (3D, S):
        # qkv_t[c, i] = sum_d Wqkv[d, c] * x[i, d] + bqkv[c]
        qkv_t = (jax.lax.dot_general(wqkv_ref[l], x, (((1,), (1,)), ((), ())),
                                     preferred_element_type=f32)
                 + bqkv_ref[l])                            # (3D, S)
        q_t = (qkv_t[0 * D:1 * D, :] * scale).reshape(H, hd, S)   # pre-scaled
        k_t = qkv_t[1 * D:2 * D, :].reshape(H, hd, S)
        v_t = qkv_t[2 * D:3 * D, :].reshape(H, hd, S)

        # Head-batched causal attention; (S, S) mask broadcast implicitly over H.
        s = jax.lax.dot_general(q_t, k_t, (((1,), (1,)), ((0,), (0,))),
                                preferred_element_type=f32)        # (H, S, S)
        s = s + mask
        s = s - jnp.max(s, axis=-1, keepdims=True)
        e = jnp.exp(s)
        # Deferred softmax normalization: row sums in (H, 1, S) orientation via a
        # ones-probe matmul; no divides — the small (H, hd, S) context is scaled
        # by an EUP approximate reciprocal instead of dividing (H, S, S) weights.
        row_sum = jax.lax.dot_general(ones_row, e, (((2,), (2,)), ((0,), (0,))),
                                      preferred_element_type=f32)  # (H, 1, S)
        ho_t = jax.lax.dot_general(v_t, e, (((2,), (2,)), ((0,), (0,))),
                                   preferred_element_type=f32)     # (H, hd, S)
        ho_t = ho_t * pl.reciprocal(row_sum, approx=True)

        # Output projection: head-concat is a free leading-dim merge
        # (H, hd, S) -> (D, S); ONE matmul (k = D) against the un-split Wo.
        att = (jax.lax.dot_general(ho_t.reshape(D, S), wo_ref[l],
                                   (((0,), (0,)), ((), ())),
                                   preferred_element_type=f32)
               + bo_ref[l])                                         # (S, D)

        # Residual + LN1, feed-forward, residual + LN2 (dropout = identity).
        adn = _layer_norm(x + att, ln1g_ref[l], ln1b_ref[l])
        h1 = _gelu(jnp.dot(adn, w1_ref[l], preferred_element_type=f32)
                   + b1_ref[l])
        h2 = jnp.dot(h1, w2_ref[l], preferred_element_type=f32) + b2_ref[l]
        x = _layer_norm(h2 + adn, ln2g_ref[l], ln2b_ref[l])

    # Final linear into a lane-dense (S, 128) zero-padded output block.
    o_ref[...] = (jnp.dot(x, fcw_ref[...], preferred_element_type=f32)
                  + fcb_ref[...])


# -------------------------------- wrapper -------------------------------------

def coffee_roaster_forward(src, fused, n_heads, output_dim):
    """src: (B, S, input_dim) -> (logits (B, S, output_dim), loss=None)."""
    B, S, in_dim = src.shape
    N = B * S
    n_layers = fused["wqkv_t"].shape[0]
    D = fused["emb_w"].shape[1]
    hd = D // n_heads

    src_flat = src.reshape(N, in_dim)
    pe_b = fused["pe"][:S] + fused["emb_b"]                 # (S, D): emb bias folded

    # (S, S) additive causal mask (0 allowed / -1e30 masked).
    r = jnp.arange(S, dtype=jnp.int32)
    mask_bias = jnp.where(r[None, :] <= r[:, None], 0.0, -1e30).astype(jnp.float32)

    operands = (src_flat, mask_bias, fused["emb_w"], pe_b,
                fused["wqkv_t"], fused["bqkv_t"], fused["wo"], fused["bo"],
                fused["ln1_g"], fused["ln1_b"], fused["w1"], fused["b1"],
                fused["w2"], fused["b2"], fused["ln2_g"], fused["ln2_b"],
                fused["fc_w_pad"], fused["fc_b_pad"])

    def fixed(a):  # full-array block, same for every grid step
        nd = a.ndim
        return pl.BlockSpec(a.shape, lambda b, _n=nd: (0,) * _n)

    in_specs = ([pl.BlockSpec((S, in_dim), lambda b: (b, 0))]
                + [fixed(a) for a in operands[1:]])

    # Advisory cost estimate for the XLA scheduler.
    flops_layer = B * (2 * S * D * 3 * D                       # fused QKV
                       + 2 * 2 * n_heads * S * S * hd          # QK^T and PV
                       + 2 * S * D * D                         # Wo
                       + 2 * 2 * S * D * 4 * D)                # FFN
    flops = n_layers * flops_layer + B * (2 * S * in_dim * D + 2 * S * D * LANE)
    transcendentals = n_layers * B * (n_heads * S * S + S * 4 * D)  # exp + tanh
    bytes_accessed = sum(int(a.size) * 4 for a in operands) + N * LANE * 4

    out_pad = pl.pallas_call(
        partial(fused_forward_kernel, n_heads=n_heads, n_layers=n_layers),
        grid=(B,),
        in_specs=in_specs,
        out_specs=pl.BlockSpec((S, LANE), lambda b: (b, 0)),
        out_shape=jax.ShapeDtypeStruct((N, LANE), jnp.float32),
        compiler_params=pltpu.CompilerParams(
            dimension_semantics=("parallel",),
            vmem_limit_bytes=32 * 1024 * 1024),
        cost_estimate=pl.CostEstimate(flops=flops,
                                      transcendentals=transcendentals,
                                      bytes_accessed=bytes_accessed),
    )(*operands)

    # TODO(synk): targets/masks MSE-loss branch and p_sampling>0 scheduled
    # sampling (data-dependent torch.rand loop) are not implemented.
    return out_pad[:, :output_dim].reshape(B, S, output_dim), None


# ------------------------------ model params ----------------------------------

def make_positional_encoding(context_length, d_model):
    position = jnp.arange(context_length, dtype=jnp.float32)[:, None]
    div_term = jnp.exp(jnp.arange(0, d_model, 2, dtype=jnp.float32) *
                       (-math.log(10000.0) / d_model))
    pe = jnp.zeros((context_length, d_model), jnp.float32)
    pe = pe.at[:, 0::2].set(jnp.sin(position * div_term))
    pe = pe.at[:, 1::2].set(jnp.cos(position * div_term))
    return pe


def init_params(key, input_dim, d_model, nhead, num_layers, output_dim, max_length):
    keys = jax.random.split(key, 2 + num_layers)

    def linear_init(k, din, dout):
        kw, kb = jax.random.split(k)
        w = jax.random.normal(kw, (din, dout), jnp.float32) * 0.02
        b = jax.random.normal(kb, (1, dout), jnp.float32) * 0.02
        return w, b

    emb_w, emb_b = linear_init(keys[0], input_dim, d_model)
    fc_w, fc_b = linear_init(keys[1], d_model, output_dim)

    blocks = []
    for l in range(num_layers):
        ks = jax.random.split(keys[2 + l], 6)
        wq, bq = linear_init(ks[0], d_model, d_model)
        wk, bk = linear_init(ks[1], d_model, d_model)
        wv, bv = linear_init(ks[2], d_model, d_model)
        wo, bo = linear_init(ks[3], d_model, d_model)
        w1, b1 = linear_init(ks[4], d_model, 4 * d_model)
        w2, b2 = linear_init(ks[5], 4 * d_model, d_model)
        blocks.append(dict(
            wq=wq, bq=bq, wk=wk, bk=bk, wv=wv, bv=bv, wo=wo, bo=bo,
            ln1_g=jnp.ones((1, d_model), jnp.float32),
            ln1_b=jnp.zeros((1, d_model), jnp.float32),
            w1=w1, b1=b1, w2=w2, b2=b2,
            ln2_g=jnp.ones((1, d_model), jnp.float32),
            ln2_b=jnp.zeros((1, d_model), jnp.float32)))

    return dict(emb_w=emb_w, emb_b=emb_b, fc_w=fc_w, fc_b=fc_b,
                pe=make_positional_encoding(max_length, d_model), blocks=blocks)


def fuse_params(params, n_heads, output_dim):
    """Stack per-layer weights on a leading L axis and pre-fuse/transpose them
    (once, at setup time) into the layouts the fused kernel consumes."""
    d_model = params["emb_w"].shape[1]
    assert (d_model // n_heads) * n_heads == d_model, "d_model % n_heads != 0"

    def per_layer(fn):
        return jnp.stack([fn(blk) for blk in params["blocks"]], axis=0)

    return dict(
        emb_w=params["emb_w"], emb_b=params["emb_b"], pe=params["pe"],
        # fused QKV, stored transposed: (L, 3D, D) / (L, 3D, 1)
        wqkv_t=per_layer(lambda b: jnp.concatenate(
            [b["wq"], b["wk"], b["wv"]], axis=1).T),
        bqkv_t=per_layer(lambda b: jnp.concatenate(
            [b["bq"], b["bk"], b["bv"]], axis=1).T),
        # un-split output projection: (L, D, D)
        wo=per_layer(lambda b: b["wo"]),
        bo=per_layer(lambda b: b["bo"]),
        ln1_g=per_layer(lambda b: b["ln1_g"]),
        ln1_b=per_layer(lambda b: b["ln1_b"]),
        w1=per_layer(lambda b: b["w1"]), b1=per_layer(lambda b: b["b1"]),
        w2=per_layer(lambda b: b["w2"]), b2=per_layer(lambda b: b["b2"]),
        ln2_g=per_layer(lambda b: b["ln2_g"]),
        ln2_b=per_layer(lambda b: b["ln2_b"]),
        # final projection zero-padded to 128 lanes for an unmasked store
        fc_w_pad=jnp.zeros((d_model, LANE), jnp.float32)
                    .at[:, :output_dim].set(params["fc_w"]),
        fc_b_pad=jnp.zeros((1, LANE), jnp.float32)
                    .at[:, :output_dim].set(params["fc_b"]),
    )


# --------------------------- pure-JAX reference -------------------------------

def reference_forward(src, params, n_heads):
    """Non-Pallas reference matching the PyTorch module (inference path)."""
    B, S, _ = src.shape
    D = params["emb_w"].shape[1]
    hd = D // n_heads
    x = src @ params["emb_w"] + params["emb_b"] + params["pe"][:S]
    causal = jnp.tril(jnp.ones((S, S), bool))
    for blk in params["blocks"]:
        q = (x @ blk["wq"] + blk["bq"]).reshape(B, S, n_heads, hd).transpose(0, 2, 1, 3)
        k = (x @ blk["wk"] + blk["bk"]).reshape(B, S, n_heads, hd).transpose(0, 2, 1, 3)
        v = (x @ blk["wv"] + blk["bv"]).reshape(B, S, n_heads, hd).transpose(0, 2, 1, 3)
        s = jnp.einsum("bhqd,bhkd->bhqk", q, k) / math.sqrt(hd)
        s = jnp.where(causal, s, -jnp.inf)
        p = jax.nn.softmax(s, axis=-1)
        o = jnp.einsum("bhqk,bhkd->bhqd", p, v).transpose(0, 2, 1, 3).reshape(B, S, D)
        att = o @ blk["wo"] + blk["bo"]
        adn = _layer_norm(x + att, blk["ln1_g"], blk["ln1_b"])
        h = _gelu(adn @ blk["w1"] + blk["b1"]) @ blk["w2"] + blk["b2"]
        x = _layer_norm(h + adn, blk["ln2_g"], blk["ln2_b"])
    return x @ params["fc_w"] + params["fc_b"]


# ----------------------------------- main --------------------------------------

if __name__ == "__main__":
    input_dim, d_model, nhead, num_layers, output_dim = 4, 32, 4, 2, 4
    max_length = 800
    B, S = 2, 8

    key = jax.random.PRNGKey(0)
    k_params, k_src = jax.random.split(key)
    params = init_params(k_params, input_dim, d_model, nhead, num_layers,
                         output_dim, max_length)
    fused = fuse_params(params, nhead, output_dim)
    src = jax.random.normal(k_src, (B, S, input_dim), jnp.float32)

    logits, loss = coffee_roaster_forward(src, fused, nhead, output_dim)
    logits = jax.block_until_ready(logits)
    assert logits.shape == (B, S, output_dim) and loss is None

    ref = reference_forward(src, params, nhead)
    assert float(jnp.max(jnp.abs(logits - ref))) < 1e-2
    print("KERNEL_OK")
</pallas_src>

<mosaic_0001>
module attributes {stable_mosaic.version = 11 : i64} {
  func.func @fused_forward_kernel(%arg0: i32, %arg1: memref<8x4xf32, #tpu.memory_space<vmem>>, %arg2: memref<8x8xf32, #tpu.memory_space<vmem>>, %arg3: memref<4x32xf32, #tpu.memory_space<vmem>>, %arg4: memref<8x32xf32, #tpu.memory_space<vmem>>, %arg5: memref<2x96x32xf32, #tpu.memory_space<vmem>>, %arg6: memref<2x96x1xf32, #tpu.memory_space<vmem>>, %arg7: memref<2x32x32xf32, #tpu.memory_space<vmem>>, %arg8: memref<2x1x32xf32, #tpu.memory_space<vmem>>, %arg9: memref<2x1x32xf32, #tpu.memory_space<vmem>>, %arg10: memref<2x1x32xf32, #tpu.memory_space<vmem>>, %arg11: memref<2x32x128xf32, #tpu.memory_space<vmem>>, %arg12: memref<2x1x128xf32, #tpu.memory_space<vmem>>, %arg13: memref<2x128x32xf32, #tpu.memory_space<vmem>>, %arg14: memref<2x1x32xf32, #tpu.memory_space<vmem>>, %arg15: memref<2x1x32xf32, #tpu.memory_space<vmem>>, %arg16: memref<2x1x32xf32, #tpu.memory_space<vmem>>, %arg17: memref<32x128xf32, #tpu.memory_space<vmem>>, %arg18: memref<1x128xf32, #tpu.memory_space<vmem>>, %arg19: memref<8x128xf32, #tpu.memory_space<vmem>>) attributes {dimension_semantics = [#tpu.dimension_semantics<parallel>], iteration_bounds = array<i64: 2>, scalar_prefetch = 0 : i64, scratch_operands = 0 : i64, tpu.core_type = #tpu.core_type<tc>, window_params = [{transform_indices = @transform_0, window_bounds = array<i64: 8, 4>}, {pipeline_mode = #tpu.pipeline_mode<synchronous>, transform_indices = @transform_1, window_bounds = array<i64: 8, 8>}, {pipeline_mode = #tpu.pipeline_mode<synchronous>, transform_indices = @transform_2, window_bounds = array<i64: 4, 32>}, {pipeline_mode = #tpu.pipeline_mode<synchronous>, transform_indices = @transform_3, window_bounds = array<i64: 8, 32>}, {pipeline_mode = #tpu.pipeline_mode<synchronous>, transform_indices = @transform_4, window_bounds = array<i64: 2, 96, 32>}, {pipeline_mode = #tpu.pipeline_mode<synchronous>, transform_indices = @transform_5, window_bounds = array<i64: 2, 96, 1>}, {pipeline_mode = #tpu.pipeline_mode<synchronous>, transform_indices = @transform_6, window_bounds = array<i64: 2, 32, 32>}, {pipeline_mode = #tpu.pipeline_mode<synchronous>, transform_indices = @transform_7, window_bounds = array<i64: 2, 1, 32>}, {pipeline_mode = #tpu.pipeline_mode<synchronous>, transform_indices = @transform_8, window_bounds = array<i64: 2, 1, 32>}, {pipeline_mode = #tpu.pipeline_mode<synchronous>, transform_indices = @transform_9, window_bounds = array<i64: 2, 1, 32>}, {pipeline_mode = #tpu.pipeline_mode<synchronous>, transform_indices = @transform_10, window_bounds = array<i64: 2, 32, 128>}, {pipeline_mode = #tpu.pipeline_mode<synchronous>, transform_indices = @transform_11, window_bounds = array<i64: 2, 1, 128>}, {pipeline_mode = #tpu.pipeline_mode<synchronous>, transform_indices = @transform_12, window_bounds = array<i64: 2, 128, 32>}, {pipeline_mode = #tpu.pipeline_mode<synchronous>, transform_indices = @transform_13, window_bounds = array<i64: 2, 1, 32>}, {pipeline_mode = #tpu.pipeline_mode<synchronous>, transform_indices = @transform_14, window_bounds = array<i64: 2, 1, 32>}, {pipeline_mode = #tpu.pipeline_mode<synchronous>, transform_indices = @transform_15, window_bounds = array<i64: 2, 1, 32>}, {pipeline_mode = #tpu.pipeline_mode<synchronous>, transform_indices = @transform_16, window_bounds = array<i64: 32, 128>}, {pipeline_mode = #tpu.pipeline_mode<synchronous>, transform_indices = @transform_17, window_bounds = array<i64: 1, 128>}, {transform_indices = @transform_18, window_bounds = array<i64: 8, 128>}]} {
    %c0 = arith.constant 0 : index
    %c0_0 = arith.constant 0 : index
    %0 = vector.load %arg1[%c0, %c0_0] : memref<8x4xf32, #tpu.memory_space<vmem>>, vector<8x4xf32>
    %c0_1 = arith.constant 0 : index
    %c0_2 = arith.constant 0 : index
    %1 = vector.load %arg3[%c0_1, %c0_2] : memref<4x32xf32, #tpu.memory_space<vmem>>, vector<4x32xf32>
    %cst = arith.constant dense<0.000000e+00> : vector<8x32xf32>
    %2 = tpu.matmul %0, %1, %cst {dimension_numbers = #tpu.dot_dimension_numbers<[1], [0], [0], [1], [0, 0, 1, 1], [], []>} : vector<8x4xf32>, vector<4x32xf32>, vector<8x32xf32> -> vector<8x32xf32>
    %c0_3 = arith.constant 0 : index
    %c0_4 = arith.constant 0 : index
    %3 = vector.load %arg4[%c0_3, %c0_4] : memref<8x32xf32, #tpu.memory_space<vmem>>, vector<8x32xf32>
    %4 = arith.addf %2, %3 : vector<8x32xf32>
    %c0_5 = arith.constant 0 : index
    %c0_6 = arith.constant 0 : index
    %5 = vector.load %arg2[%c0_5, %c0_6] : memref<8x8xf32, #tpu.memory_space<vmem>>, vector<8x8xf32>
    %cst_7 = arith.constant 1.000000e+00 : f32
    %6 = vector.broadcast %cst_7 : f32 to vector<4x1x8xf32>
    %c0_8 = arith.constant 0 : index
    %c0_9 = arith.constant 0 : index
    %c0_10 = arith.constant 0 : index
    %7 = vector.load %arg5[%c0_8, %c0_9, %c0_10] : memref<2x96x32xf32, #tpu.memory_space<vmem>>, vector<1x96x32xf32>
    %8 = vector.shape_cast %7 : vector<1x96x32xf32> to vector<96x32xf32>
    %cst_11 = arith.constant dense<0.000000e+00> : vector<96x8xf32>
    %9 = tpu.matmul %8, %4, %cst_11 {dimension_numbers = #tpu.dot_dimension_numbers<[1], [1], [0], [0], [0, 0, 1, 0], [], []>} : vector<96x32xf32>, vector<8x32xf32>, vector<96x8xf32> -> vector<96x8xf32>
    %c0_12 = arith.constant 0 : index
    %c0_13 = arith.constant 0 : index
    %c0_14 = arith.constant 0 : index
    %10 = vector.load %arg6[%c0_12, %c0_13, %c0_14] : memref<2x96x1xf32, #tpu.memory_space<vmem>>, vector<1x96x1xf32>
    %11 = vector.shape_cast %10 : vector<1x96x1xf32> to vector<96x1xf32>
    %12 = vector.broadcast %11 : vector<96x1xf32> to vector<96x8xf32>
    %13 = arith.addf %9, %12 : vector<96x8xf32>
    %14 = vector.extract_strided_slice %13 {offsets = [0, 0], sizes = [32, 8], strides = [1, 1]} : vector<96x8xf32> to vector<32x8xf32>
    %cst_15 = arith.constant 0.353553385 : f32
    %15 = vector.broadcast %cst_15 : f32 to vector<32x8xf32>
    %16 = arith.mulf %14, %15 : vector<32x8xf32>
    %17 = vector.shape_cast %16 : vector<32x8xf32> to vector<4x8x8xf32>
    %18 = vector.extract_strided_slice %13 {offsets = [32, 0], sizes = [32, 8], strides = [1, 1]} : vector<96x8xf32> to vector<32x8xf32>
    %19 = vector.shape_cast %18 : vector<32x8xf32> to vector<4x8x8xf32>
    %20 = vector.extract_strided_slice %13 {offsets = [64, 0], sizes = [32, 8], strides = [1, 1]} : vector<96x8xf32> to vector<32x8xf32>
    %21 = vector.shape_cast %20 : vector<32x8xf32> to vector<4x8x8xf32>
    %cst_16 = arith.constant dense<0.000000e+00> : vector<4x8x8xf32>
    %22 = tpu.matmul %17, %19, %cst_16 {dimension_numbers = #tpu.dot_dimension_numbers<[1], [1], [2], [2], [0, 0, 0, 2, 1, 2], [0], [0]>} : vector<4x8x8xf32>, vector<4x8x8xf32>, vector<4x8x8xf32> -> vector<4x8x8xf32>
    %23 = vector.shape_cast %5 : vector<8x8xf32> to vector<1x8x8xf32>
    %24 = vector.broadcast %23 : vector<1x8x8xf32> to vector<4x8x8xf32>
    %25 = arith.addf %22, %24 : vector<4x8x8xf32>
    %cst_17 = arith.constant dense<0xFF800000> : vector<4x8xf32>
    %26 = vector.multi_reduction <maximumf>, %25, %cst_17 [2] : vector<4x8x8xf32> to vector<4x8xf32>
    %27 = vector.shape_cast %26 : vector<4x8xf32> to vector<4x8x1xf32>
    %28 = vector.broadcast %27 : vector<4x8x1xf32> to vector<4x8x8xf32>
    %29 = arith.subf %25, %28 : vector<4x8x8xf32>
    %30 = math.exp %29 : vector<4x8x8xf32>
    %cst_18 = arith.constant dense<0.000000e+00> : vector<4x1x8xf32>
    %31 = tpu.matmul %6, %30, %cst_18 {dimension_numbers = #tpu.dot_dimension_numbers<[2], [2], [1], [1], [0, 0, 0, 1, 1, 1], [0], [0]>} : vector<4x1x8xf32>, vector<4x8x8xf32>, vector<4x1x8xf32> -> vector<4x1x8xf32>
    %cst_19 = arith.constant dense<0.000000e+00> : vector<4x8x8xf32>
    %32 = tpu.matmul %21, %30, %cst_19 {dimension_numbers = #tpu.dot_dimension_numbers<[2], [2], [1], [1], [0, 0, 0, 1, 1, 1], [0], [0]>} : vector<4x8x8xf32>, vector<4x8x8xf32>, vector<4x8x8xf32> -> vector<4x8x8xf32>
    %33 = tpu.reciprocal %31 {approx = true} : vector<4x1x8xf32> -> vector<4x1x8xf32>
    %34 = vector.broadcast %33 : vector<4x1x8xf32> to vector<4x8x8xf32>
    %35 = arith.mulf %32, %34 : vector<4x8x8xf32>
    %36 = vector.shape_cast %35 : vector<4x8x8xf32> to vector<32x8xf32>
    %c0_20 = arith.constant 0 : index
    %c0_21 = arith.constant 0 : index
    %c0_22 = arith.constant 0 : index
    %37 = vector.load %arg7[%c0_20, %c0_21, %c0_22] : memref<2x32x32xf32, #tpu.memory_space<vmem>>, vector<1x32x32xf32>
    %38 = vector.shape_cast %37 : vector<1x32x32xf32> to vector<32x32xf32>
    %cst_23 = arith.constant dense<0.000000e+00> : vector<8x32xf32>
    %39 = tpu.matmul %36, %38, %cst_23 {dimension_numbers = #tpu.dot_dimension_numbers<[0], [0], [1], [1], [0, 1, 1, 1], [], []>} : vector<32x8xf32>, vector<32x32xf32>, vector<8x32xf32> -> vector<8x32xf32>
    %c0_24 = arith.constant 0 : index
    %c0_25 = arith.constant 0 : index
    %c0_26 = arith.constant 0 : index
    %40 = vector.load %arg8[%c0_24, %c0_25, %c0_26] : memref<2x1x32xf32, #tpu.memory_space<vmem>>, vector<1x1x32xf32>
    %41 = vector.shape_cast %40 : vector<1x1x32xf32> to vector<1x32xf32>
    %42 = vector.broadcast %41 : vector<1x32xf32> to vector<8x32xf32>
    %43 = arith.addf %39, %42 : vector<8x32xf32>
    %44 = arith.addf %4, %43 : vector<8x32xf32>
    %c0_27 = arith.constant 0 : index
    %c0_28 = arith.constant 0 : index
    %c0_29 = arith.constant 0 : index
    %45 = vector.load %arg9[%c0_27, %c0_28, %c0_29] : memref<2x1x32xf32, #tpu.memory_space<vmem>>, vector<1x1x32xf32>
    %46 = vector.shape_cast %45 : vector<1x1x32xf32> to vector<1x32xf32>
    %c0_30 = arith.constant 0 : index
    %c0_31 = arith.constant 0 : index
    %c0_32 = arith.constant 0 : index
    %47 = vector.load %arg10[%c0_30, %c0_31, %c0_32] : memref<2x1x32xf32, #tpu.memory_space<vmem>>, vector<1x1x32xf32>
    %48 = vector.shape_cast %47 : vector<1x1x32xf32> to vector<1x32xf32>
    %cst_33 = arith.constant dense<0.000000e+00> : vector<8xf32>
    %49 = vector.multi_reduction <add>, %44, %cst_33 [1] : vector<8x32xf32> to vector<8xf32>
    %50 = vector.shape_cast %49 : vector<8xf32> to vector<8x1xf32>
    %cst_34 = arith.constant 3.200000e+01 : f32
    %51 = vector.broadcast %cst_34 : f32 to vector<8x1xf32>
    %52 = arith.divf %50, %51 : vector<8x1xf32>
    %53 = vector.broadcast %52 : vector<8x1xf32> to vector<8x32xf32>
    %54 = arith.subf %44, %53 : vector<8x32xf32>
    %55 = arith.mulf %54, %54 : vector<8x32xf32>
    %cst_35 = arith.constant dense<0.000000e+00> : vector<8xf32>
    %56 = vector.multi_reduction <add>, %55, %cst_35 [1] : vector<8x32xf32> to vector<8xf32>
    %57 = vector.shape_cast %56 : vector<8xf32> to vector<8x1xf32>
    %cst_36 = arith.constant 3.200000e+01 : f32
    %58 = vector.broadcast %cst_36 : f32 to vector<8x1xf32>
    %59 = arith.divf %57, %58 : vector<8x1xf32>
    %60 = vector.broadcast %52 : vector<8x1xf32> to vector<8x32xf32>
    %61 = arith.subf %44, %60 : vector<8x32xf32>
    %cst_37 = arith.constant 9.99999974E-6 : f32
    %62 = vector.broadcast %cst_37 : f32 to vector<8x1xf32>
    %63 = arith.addf %59, %62 : vector<8x1xf32>
    %64 = math.rsqrt %63 : vector<8x1xf32>
    %65 = vector.broadcast %64 : vector<8x1xf32> to vector<8x32xf32>
    %66 = arith.mulf %61, %65 : vector<8x32xf32>
    %67 = vector.broadcast %46 : vector<1x32xf32> to vector<8x32xf32>
    %68 = arith.mulf %66, %67 : vector<8x32xf32>
    %69 = vector.broadcast %48 : vector<1x32xf32> to vector<8x32xf32>
    %70 = arith.addf %68, %69 : vector<8x32xf32>
    %c0_38 = arith.constant 0 : index
    %c0_39 = arith.constant 0 : index
    %c0_40 = arith.constant 0 : index
    %71 = vector.load %arg11[%c0_38, %c0_39, %c0_40] : memref<2x32x128xf32, #tpu.memory_space<vmem>>, vector<1x32x128xf32>
    %72 = vector.shape_cast %71 : vector<1x32x128xf32> to vector<32x128xf32>
    %cst_41 = arith.constant dense<0.000000e+00> : vector<8x128xf32>
    %73 = tpu.matmul %70, %72, %cst_41 {dimension_numbers = #tpu.dot_dimension_numbers<[1], [0], [0], [1], [0, 0, 1, 1], [], []>} : vector<8x32xf32>, vector<32x128xf32>, vector<8x128xf32> -> vector<8x128xf32>
    %c0_42 = arith.constant 0 : index
    %c0_43 = arith.constant 0 : index
    %c0_44 = arith.constant 0 : index
    %74 = vector.load %arg12[%c0_42, %c0_43, %c0_44] : memref<2x1x128xf32, #tpu.memory_space<vmem>>, vector<1x1x128xf32>
    %75 = vector.shape_cast %74 : vector<1x1x128xf32> to vector<1x128xf32>
    %76 = vector.broadcast %75 : vector<1x128xf32> to vector<8x128xf32>
    %77 = arith.addf %73, %76 : vector<8x128xf32>
    %cst_45 = arith.constant 5.000000e-01 : f32
    %78 = vector.broadcast %cst_45 : f32 to vector<8x128xf32>
    %79 = arith.mulf %78, %77 : vector<8x128xf32>
    %80 = arith.mulf %77, %77 : vector<8x128xf32>
    %81 = arith.mulf %77, %80 : vector<8x128xf32>
    %cst_46 = arith.constant 4.471500e-02 : f32
    %82 = vector.broadcast %cst_46 : f32 to vector<8x128xf32>
    %83 = arith.mulf %82, %81 : vector<8x128xf32>
    %84 = arith.addf %77, %83 : vector<8x128xf32>
    %cst_47 = arith.constant 0.797884583 : f32
    %85 = vector.broadcast %cst_47 : f32 to vector<8x128xf32>
    %86 = arith.mulf %85, %84 : vector<8x128xf32>
    %87 = math.tanh %86 : vector<8x128xf32>
    %cst_48 = arith.constant 1.000000e+00 : f32
    %88 = vector.broadcast %cst_48 : f32 to vector<8x128xf32>
    %89 = arith.addf %88, %87 : vector<8x128xf32>
    %90 = arith.mulf %79, %89 : vector<8x128xf32>
    %c0_49 = arith.constant 0 : index
    %c0_50 = arith.constant 0 : index
    %c0_51 = arith.constant 0 : index
    %91 = vector.load %arg13[%c0_49, %c0_50, %c0_51] : memref<2x128x32xf32, #tpu.memory_space<vmem>>, vector<1x128x32xf32>
    %92 = vector.shape_cast %91 : vector<1x128x32xf32> to vector<128x32xf32>
    %cst_52 = arith.constant dense<0.000000e+00> : vector<8x32xf32>
    %93 = tpu.matmul %90, %92, %cst_52 {dimension_numbers = #tpu.dot_dimension_numbers<[1], [0], [0], [1], [0, 0, 1, 1], [], []>} : vector<8x128xf32>, vector<128x32xf32>, vector<8x32xf32> -> vector<8x32xf32>
    %c0_53 = arith.constant 0 : index
    %c0_54 = arith.constant 0 : index
    %c0_55 = arith.constant 0 : index
    %94 = vector.load %arg14[%c0_53, %c0_54, %c0_55] : memref<2x1x32xf32, #tpu.memory_space<vmem>>, vector<1x1x32xf32>
    %95 = vector.shape_cast %94 : vector<1x1x32xf32> to vector<1x32xf32>
    %96 = vector.broadcast %95 : vector<1x32xf32> to vector<8x32xf32>
    %97 = arith.addf %93, %96 : vector<8x32xf32>
    %98 = arith.addf %97, %70 : vector<8x32xf32>
    %c0_56 = arith.constant 0 : index
    %c0_57 = arith.constant 0 : index
    %c0_58 = arith.constant 0 : index
    %99 = vector.load %arg15[%c0_56, %c0_57, %c0_58] : memref<2x1x32xf32, #tpu.memory_space<vmem>>, vector<1x1x32xf32>
    %100 = vector.shape_cast %99 : vector<1x1x32xf32> to vector<1x32xf32>
    %c0_59 = arith.constant 0 : index
    %c0_60 = arith.constant 0 : index
    %c0_61 = arith.constant 0 : index
    %101 = vector.load %arg16[%c0_59, %c0_60, %c0_61] : memref<2x1x32xf32, #tpu.memory_space<vmem>>, vector<1x1x32xf32>
    %102 = vector.shape_cast %101 : vector<1x1x32xf32> to vector<1x32xf32>
    %cst_62 = arith.constant dense<0.000000e+00> : vector<8xf32>
    %103 = vector.multi_reduction <add>, %98, %cst_62 [1] : vector<8x32xf32> to vector<8xf32>
    %104 = vector.shape_cast %103 : vector<8xf32> to vector<8x1xf32>
    %cst_63 = arith.constant 3.200000e+01 : f32
    %105 = vector.broadcast %cst_63 : f32 to vector<8x1xf32>
    %106 = arith.divf %104, %105 : vector<8x1xf32>
    %107 = vector.broadcast %106 : vector<8x1xf32> to vector<8x32xf32>
    %108 = arith.subf %98, %107 : vector<8x32xf32>
    %109 = arith.mulf %108, %108 : vector<8x32xf32>
    %cst_64 = arith.constant dense<0.000000e+00> : vector<8xf32>
    %110 = vector.multi_reduction <add>, %109, %cst_64 [1] : vector<8x32xf32> to vector<8xf32>
    %111 = vector.shape_cast %110 : vector<8xf32> to vector<8x1xf32>
    %cst_65 = arith.constant 3.200000e+01 : f32
    %112 = vector.broadcast %cst_65 : f32 to vector<8x1xf32>
    %113 = arith.divf %111, %112 : vector<8x1xf32>
    %114 = vector.broadcast %106 : vector<8x1xf32> to vector<8x32xf32>
    %115 = arith.subf %98, %114 : vector<8x32xf32>
    %cst_66 = arith.constant 9.99999974E-6 : f32
    %116 = vector.broadcast %cst_66 : f32 to vector<8x1xf32>
    %117 = arith.addf %113, %116 : vector<8x1xf32>
    %118 = math.rsqrt %117 : vector<8x1xf32>
    %119 = vector.broadcast %118 : vector<8x1xf32> to vector<8x32xf32>
    %120 = arith.mulf %115, %119 : vector<8x32xf32>
    %121 = vector.broadcast %100 : vector<1x32xf32> to vector<8x32xf32>
    %122 = arith.mulf %120, %121 : vector<8x32xf32>
    %123 = vector.broadcast %102 : vector<1x32xf32> to vector<8x32xf32>
    %124 = arith.addf %122, %123 : vector<8x32xf32>
    %c1 = arith.constant 1 : index
    %c0_67 = arith.constant 0 : index
    %c0_68 = arith.constant 0 : index
    %125 = vector.load %arg5[%c1, %c0_67, %c0_68] : memref<2x96x32xf32, #tpu.memory_space<vmem>>, vector<1x96x32xf32>
    %126 = vector.shape_cast %125 : vector<1x96x32xf32> to vector<96x32xf32>
    %cst_69 = arith.constant dense<0.000000e+00> : vector<96x8xf32>
    %127 = tpu.matmul %126, %124, %cst_69 {dimension_numbers = #tpu.dot_dimension_numbers<[1], [1], [0], [0], [0, 0, 1, 0], [], []>} : vector<96x32xf32>, vector<8x32xf32>, vector<96x8xf32> -> vector<96x8xf32>
    %c1_70 = arith.constant 1 : index
    %c0_71 = arith.constant 0 : index
    %c0_72 = arith.constant 0 : index
    %128 = vector.load %arg6[%c1_70, %c0_71, %c0_72] : memref<2x96x1xf32, #tpu.memory_space<vmem>>, vector<1x96x1xf32>
    %129 = vector.shape_cast %128 : vector<1x96x1xf32> to vector<96x1xf32>
    %130 = vector.broadcast %129 : vector<96x1xf32> to vector<96x8xf32>
    %131 = arith.addf %127, %130 : vector<96x8xf32>
    %132 = vector.extract_strided_slice %131 {offsets = [0, 0], sizes = [32, 8], strides = [1, 1]} : vector<96x8xf32> to vector<32x8xf32>
    %cst_73 = arith.constant 0.353553385 : f32
    %133 = vector.broadcast %cst_73 : f32 to vector<32x8xf32>
    %134 = arith.mulf %132, %133 : vector<32x8xf32>
    %135 = vector.shape_cast %134 : vector<32x8xf32> to vector<4x8x8xf32>
    %136 = vector.extract_strided_slice %131 {offsets = [32, 0], sizes = [32, 8], strides = [1, 1]} : vector<96x8xf32> to vector<32x8xf32>
    %137 = vector.shape_cast %136 : vector<32x8xf32> to vector<4x8x8xf32>
    %138 = vector.extract_strided_slice %131 {offsets = [64, 0], sizes = [32, 8], strides = [1, 1]} : vector<96x8xf32> to vector<32x8xf32>
    %139 = vector.shape_cast %138 : vector<32x8xf32> to vector<4x8x8xf32>
    %cst_74 = arith.constant dense<0.000000e+00> : vector<4x8x8xf32>
    %140 = tpu.matmul %135, %137, %cst_74 {dimension_numbers = #tpu.dot_dimension_numbers<[1], [1], [2], [2], [0, 0, 0, 2, 1, 2], [0], [0]>} : vector<4x8x8xf32>, vector<4x8x8xf32>, vector<4x8x8xf32> -> vector<4x8x8xf32>
    %141 = vector.shape_cast %5 : vector<8x8xf32> to vector<1x8x8xf32>
    %142 = vector.broadcast %141 : vector<1x8x8xf32> to vector<4x8x8xf32>
    %143 = arith.addf %140, %142 : vector<4x8x8xf32>
    %cst_75 = arith.constant dense<0xFF800000> : vector<4x8xf32>
    %144 = vector.multi_reduction <maximumf>, %143, %cst_75 [2] : vector<4x8x8xf32> to vector<4x8xf32>
    %145 = vector.shape_cast %144 : vector<4x8xf32> to vector<4x8x1xf32>
    %146 = vector.broadcast %145 : vector<4x8x1xf32> to vector<4x8x8xf32>
    %147 = arith.subf %143, %146 : vector<4x8x8xf32>
    %148 = math.exp %147 : vector<4x8x8xf32>
    %cst_76 = arith.constant dense<0.000000e+00> : vector<4x1x8xf32>
    %149 = tpu.matmul %6, %148, %cst_76 {dimension_numbers = #tpu.dot_dimension_numbers<[2], [2], [1], [1], [0, 0, 0, 1, 1, 1], [0], [0]>} : vector<4x1x8xf32>, vector<4x8x8xf32>, vector<4x1x8xf32> -> vector<4x1x8xf32>
    %cst_77 = arith.constant dense<0.000000e+00> : vector<4x8x8xf32>
    %150 = tpu.matmul %139, %148, %cst_77 {dimension_numbers = #tpu.dot_dimension_numbers<[2], [2], [1], [1], [0, 0, 0, 1, 1, 1], [0], [0]>} : vector<4x8x8xf32>, vector<4x8x8xf32>, vector<4x8x8xf32> -> vector<4x8x8xf32>
    %151 = tpu.reciprocal %149 {approx = true} : vector<4x1x8xf32> -> vector<4x1x8xf32>
    %152 = vector.broadcast %151 : vector<4x1x8xf32> to vector<4x8x8xf32>
    %153 = arith.mulf %150, %152 : vector<4x8x8xf32>
    %154 = vector.shape_cast %153 : vector<4x8x8xf32> to vector<32x8xf32>
    %c1_78 = arith.constant 1 : index
    %c0_79 = arith.constant 0 : index
    %c0_80 = arith.constant 0 : index
    %155 = vector.load %arg7[%c1_78, %c0_79, %c0_80] : memref<2x32x32xf32, #tpu.memory_space<vmem>>, vector<1x32x32xf32>
    %156 = vector.shape_cast %155 : vector<1x32x32xf32> to vector<32x32xf32>
    %cst_81 = arith.constant dense<0.000000e+00> : vector<8x32xf32>
    %157 = tpu.matmul %154, %156, %cst_81 {dimension_numbers = #tpu.dot_dimension_numbers<[0], [0], [1], [1], [0, 1, 1, 1], [], []>} : vector<32x8xf32>, vector<32x32xf32>, vector<8x32xf32> -> vector<8x32xf32>
    %c1_82 = arith.constant 1 : index
    %c0_83 = arith.constant 0 : index
    %c0_84 = arith.constant 0 : index
    %158 = vector.load %arg8[%c1_82, %c0_83, %c0_84] : memref<2x1x32xf32, #tpu.memory_space<vmem>>, vector<1x1x32xf32>
    %159 = vector.shape_cast %158 : vector<1x1x32xf32> to vector<1x32xf32>
    %160 = vector.broadcast %159 : vector<1x32xf32> to vector<8x32xf32>
    %161 = arith.addf %157, %160 : vector<8x32xf32>
    %162 = arith.addf %124, %161 : vector<8x32xf32>
    %c1_85 = arith.constant 1 : index
    %c0_86 = arith.constant 0 : index
    %c0_87 = arith.constant 0 : index
    %163 = vector.load %arg9[%c1_85, %c0_86, %c0_87] : memref<2x1x32xf32, #tpu.memory_space<vmem>>, vector<1x1x32xf32>
    %164 = vector.shape_cast %163 : vector<1x1x32xf32> to vector<1x32xf32>
    %c1_88 = arith.constant 1 : index
    %c0_89 = arith.constant 0 : index
    %c0_90 = arith.constant 0 : index
    %165 = vector.load %arg10[%c1_88, %c0_89, %c0_90] : memref<2x1x32xf32, #tpu.memory_space<vmem>>, vector<1x1x32xf32>
    %166 = vector.shape_cast %165 : vector<1x1x32xf32> to vector<1x32xf32>
    %cst_91 = arith.constant dense<0.000000e+00> : vector<8xf32>
    %167 = vector.multi_reduction <add>, %162, %cst_91 [1] : vector<8x32xf32> to vector<8xf32>
    %168 = vector.shape_cast %167 : vector<8xf32> to vector<8x1xf32>
    %cst_92 = arith.constant 3.200000e+01 : f32
    %169 = vector.broadcast %cst_92 : f32 to vector<8x1xf32>
    %170 = arith.divf %168, %169 : vector<8x1xf32>
    %171 = vector.broadcast %170 : vector<8x1xf32> to vector<8x32xf32>
    %172 = arith.subf %162, %171 : vector<8x32xf32>
    %173 = arith.mulf %172, %172 : vector<8x32xf32>
    %cst_93 = arith.constant dense<0.000000e+00> : vector<8xf32>
    %174 = vector.multi_reduction <add>, %173, %cst_93 [1] : vector<8x32xf32> to vector<8xf32>
    %175 = vector.shape_cast %174 : vector<8xf32> to vector<8x1xf32>
    %cst_94 = arith.constant 3.200000e+01 : f32
    %176 = vector.broadcast %cst_94 : f32 to vector<8x1xf32>
    %177 = arith.divf %175, %176 : vector<8x1xf32>
    %178 = vector.broadcast %170 : vector<8x1xf32> to vector<8x32xf32>
    %179 = arith.subf %162, %178 : vector<8x32xf32>
    %cst_95 = arith.constant 9.99999974E-6 : f32
    %180 = vector.broadcast %cst_95 : f32 to vector<8x1xf32>
    %181 = arith.addf %177, %180 : vector<8x1xf32>
    %182 = math.rsqrt %181 : vector<8x1xf32>
    %183 = vector.broadcast %182 : vector<8x1xf32> to vector<8x32xf32>
    %184 = arith.mulf %179, %183 : vector<8x32xf32>
    %185 = vector.broadcast %164 : vector<1x32xf32> to vector<8x32xf32>
    %186 = arith.mulf %184, %185 : vector<8x32xf32>
    %187 = vector.broadcast %166 : vector<1x32xf32> to vector<8x32xf32>
    %188 = arith.addf %186, %187 : vector<8x32xf32>
    %c1_96 = arith.constant 1 : index
    %c0_97 = arith.constant 0 : index
    %c0_98 = arith.constant 0 : index
    %189 = vector.load %arg11[%c1_96, %c0_97, %c0_98] : memref<2x32x128xf32, #tpu.memory_space<vmem>>, vector<1x32x128xf32>
    %190 = vector.shape_cast %189 : vector<1x32x128xf32> to vector<32x128xf32>
    %cst_99 = arith.constant dense<0.000000e+00> : vector<8x128xf32>
    %191 = tpu.matmul %188, %190, %cst_99 {dimension_numbers = #tpu.dot_dimension_numbers<[1], [0], [0], [1], [0, 0, 1, 1], [], []>} : vector<8x32xf32>, vector<32x128xf32>, vector<8x128xf32> -> vector<8x128xf32>
    %c1_100 = arith.constant 1 : index
    %c0_101 = arith.constant 0 : index
    %c0_102 = arith.constant 0 : index
    %192 = vector.load %arg12[%c1_100, %c0_101, %c0_102] : memref<2x1x128xf32, #tpu.memory_space<vmem>>, vector<1x1x128xf32>
    %193 = vector.shape_cast %192 : vector<1x1x128xf32> to vector<1x128xf32>
    %194 = vector.broadcast %193 : vector<1x128xf32> to vector<8x128xf32>
    %195 = arith.addf %191, %194 : vector<8x128xf32>
    %cst_103 = arith.constant 5.000000e-01 : f32
    %196 = vector.broadcast %cst_103 : f32 to vector<8x128xf32>
    %197 = arith.mulf %196, %195 : vector<8x128xf32>
    %198 = arith.mulf %195, %195 : vector<8x128xf32>
    %199 = arith.mulf %195, %198 : vector<8x128xf32>
    %cst_104 = arith.constant 4.471500e-02 : f32
    %200 = vector.broadcast %cst_104 : f32 to vector<8x128xf32>
    %201 = arith.mulf %200, %199 : vector<8x128xf32>
    %202 = arith.addf %195, %201 : vector<8x128xf32>
    %cst_105 = arith.constant 0.797884583 : f32
    %203 = vector.broadcast %cst_105 : f32 to vector<8x128xf32>
    %204 = arith.mulf %203, %202 : vector<8x128xf32>
    %205 = math.tanh %204 : vector<8x128xf32>
    %cst_106 = arith.constant 1.000000e+00 : f32
    %206 = vector.broadcast %cst_106 : f32 to vector<8x128xf32>
    %207 = arith.addf %206, %205 : vector<8x128xf32>
    %208 = arith.mulf %197, %207 : vector<8x128xf32>
    %c1_107 = arith.constant 1 : index
    %c0_108 = arith.constant 0 : index
    %c0_109 = arith.constant 0 : index
    %209 = vector.load %arg13[%c1_107, %c0_108, %c0_109] : memref<2x128x32xf32, #tpu.memory_space<vmem>>, vector<1x128x32xf32>
    %210 = vector.shape_cast %209 : vector<1x128x32xf32> to vector<128x32xf32>
    %cst_110 = arith.constant dense<0.000000e+00> : vector<8x32xf32>
    %211 = tpu.matmul %208, %210, %cst_110 {dimension_numbers = #tpu.dot_dimension_numbers<[1], [0], [0], [1], [0, 0, 1, 1], [], []>} : vector<8x128xf32>, vector<128x32xf32>, vector<8x32xf32> -> vector<8x32xf32>
    %c1_111 = arith.constant 1 : index
    %c0_112 = arith.constant 0 : index
    %c0_113 = arith.constant 0 : index
    %212 = vector.load %arg14[%c1_111, %c0_112, %c0_113] : memref<2x1x32xf32, #tpu.memory_space<vmem>>, vector<1x1x32xf32>
    %213 = vector.shape_cast %212 : vector<1x1x32xf32> to vector<1x32xf32>
    %214 = vector.broadcast %213 : vector<1x32xf32> to vector<8x32xf32>
    %215 = arith.addf %211, %214 : vector<8x32xf32>
    %216 = arith.addf %215, %188 : vector<8x32xf32>
    %c1_114 = arith.constant 1 : index
    %c0_115 = arith.constant 0 : index
    %c0_116 = arith.constant 0 : index
    %217 = vector.load %arg15[%c1_114, %c0_115, %c0_116] : memref<2x1x32xf32, #tpu.memory_space<vmem>>, vector<1x1x32xf32>
    %218 = vector.shape_cast %217 : vector<1x1x32xf32> to vector<1x32xf32>
    %c1_117 = arith.constant 1 : index
    %c0_118 = arith.constant 0 : index
    %c0_119 = arith.constant 0 : index
    %219 = vector.load %arg16[%c1_117, %c0_118, %c0_119] : memref<2x1x32xf32, #tpu.memory_space<vmem>>, vector<1x1x32xf32>
    %220 = vector.shape_cast %219 : vector<1x1x32xf32> to vector<1x32xf32>
    %cst_120 = arith.constant dense<0.000000e+00> : vector<8xf32>
    %221 = vector.multi_reduction <add>, %216, %cst_120 [1] : vector<8x32xf32> to vector<8xf32>
    %222 = vector.shape_cast %221 : vector<8xf32> to vector<8x1xf32>
    %cst_121 = arith.constant 3.200000e+01 : f32
    %223 = vector.broadcast %cst_121 : f32 to vector<8x1xf32>
    %224 = arith.divf %222, %223 : vector<8x1xf32>
    %225 = vector.broadcast %224 : vector<8x1xf32> to vector<8x32xf32>
    %226 = arith.subf %216, %225 : vector<8x32xf32>
    %227 = arith.mulf %226, %226 : vector<8x32xf32>
    %cst_122 = arith.constant dense<0.000000e+00> : vector<8xf32>
    %228 = vector.multi_reduction <add>, %227, %cst_122 [1] : vector<8x32xf32> to vector<8xf32>
    %229 = vector.shape_cast %228 : vector<8xf32> to vector<8x1xf32>
    %cst_123 = arith.constant 3.200000e+01 : f32
    %230 = vector.broadcast %cst_123 : f32 to vector<8x1xf32>
    %231 = arith.divf %229, %230 : vector<8x1xf32>
    %232 = vector.broadcast %224 : vector<8x1xf32> to vector<8x32xf32>
    %233 = arith.subf %216, %232 : vector<8x32xf32>
    %cst_124 = arith.constant 9.99999974E-6 : f32
    %234 = vector.broadcast %cst_124 : f32 to vector<8x1xf32>
    %235 = arith.addf %231, %234 : vector<8x1xf32>
    %236 = math.rsqrt %235 : vector<8x1xf32>
    %237 = vector.broadcast %236 : vector<8x1xf32> to vector<8x32xf32>
    %238 = arith.mulf %233, %237 : vector<8x32xf32>
    %239 = vector.broadcast %218 : vector<1x32xf32> to vector<8x32xf32>
    %240 = arith.mulf %238, %239 : vector<8x32xf32>
    %241 = vector.broadcast %220 : vector<1x32xf32> to vector<8x32xf32>
    %242 = arith.addf %240, %241 : vector<8x32xf32>
    %c0_125 = arith.constant 0 : index
    %c0_126 = arith.constant 0 : index
    %243 = vector.load %arg17[%c0_125, %c0_126] : memref<32x128xf32, #tpu.memory_space<vmem>>, vector<32x128xf32>
    %cst_127 = arith.constant dense<0.000000e+00> : vector<8x128xf32>
    %244 = tpu.matmul %242, %243, %cst_127 {dimension_numbers = #tpu.dot_dimension_numbers<[1], [0], [0], [1], [0, 0, 1, 1], [], []>} : vector<8x32xf32>, vector<32x128xf32>, vector<8x128xf32> -> vector<8x128xf32>
    %c0_128 = arith.constant 0 : index
    %c0_129 = arith.constant 0 : index
    %245 = vector.load %arg18[%c0_128, %c0_129] : memref<1x128xf32, #tpu.memory_space<vmem>>, vector<1x128xf32>
    %246 = vector.broadcast %245 : vector<1x128xf32> to vector<8x128xf32>
    %247 = arith.addf %244, %246 : vector<8x128xf32>
    %c0_130 = arith.constant 0 : index
    %c0_131 = arith.constant 0 : index
    %248 = vector.load %arg19[%c0_130, %c0_131] : memref<8x128xf32, #tpu.memory_space<vmem>>, vector<8x128xf32>
    tpu.vector_store %arg19[%c0_130, %c0_131], %247 {strides = array<i32>} : memref<8x128xf32, #tpu.memory_space<vmem>>, vector<8x128xf32>,
    return
  }
  func.func @transform_0(%arg0: i32) -> (i32, i32) {
    %c0_i32 = arith.constant 0 : i32
    %c0_i32_0 = arith.constant 0 : i32
    return %arg0, %c0_i32 : i32, i32
  }
  func.func @transform_1(%arg0: i32) -> (i32, i32) {
    %c0_i32 = arith.constant 0 : i32
    %c0_i32_0 = arith.constant 0 : i32
    %c0_i32_1 = arith.constant 0 : i32
    return %c0_i32, %c0_i32_0 : i32, i32
  }
  func.func @transform_2(%arg0: i32) -> (i32, i32) {
    %c0_i32 = arith.constant 0 : i32
    %c0_i32_0 = arith.constant 0 : i32
    %c0_i32_1 = arith.constant 0 : i32
    return %c0_i32, %c0_i32_0 : i32, i32
  }
  func.func @transform_3(%arg0: i32) -> (i32, i32) {
    %c0_i32 = arith.constant 0 : i32
    %c0_i32_0 = arith.constant 0 : i32
    %c0_i32_1 = arith.constant 0 : i32
    return %c0_i32, %c0_i32_0 : i32, i32
  }
  func.func @transform_4(%arg0: i32) -> (i32, i32, i32) {
    %c0_i32 = arith.constant 0 : i32
    %c0_i32_0 = arith.constant 0 : i32
    %c0_i32_1 = arith.constant 0 : i32
    %c0_i32_2 = arith.constant 0 : i32
    return %c0_i32, %c0_i32_0, %c0_i32_1 : i32, i32, i32
  }
  func.func @transform_5(%arg0: i32) -> (i32, i32, i32) {
    %c0_i32 = arith.constant 0 : i32
    %c0_i32_0 = arith.constant 0 : i32
    %c0_i32_1 = arith.constant 0 : i32
    %c0_i32_2 = arith.constant 0 : i32
    return %c0_i32, %c0_i32_0, %c0_i32_1 : i32, i32, i32
  }
  func.func @transform_6(%arg0: i32) -> (i32, i32, i32) {
    %c0_i32 = arith.constant 0 : i32
    %c0_i32_0 = arith.constant 0 : i32
    %c0_i32_1 = arith.constant 0 : i32
    %c0_i32_2 = arith.constant 0 : i32
    return %c0_i32, %c0_i32_0, %c0_i32_1 : i32, i32, i32
  }
  func.func @transform_7(%arg0: i32) -> (i32, i32, i32) {
    %c0_i32 = arith.constant 0 : i32
    %c0_i32_0 = arith.constant 0 : i32
    %c0_i32_1 = arith.constant 0 : i32
    %c0_i32_2 = arith.constant 0 : i32
    return %c0_i32, %c0_i32_0, %c0_i32_1 : i32, i32, i32
  }
  func.func @transform_8(%arg0: i32) -> (i32, i32, i32) {
    %c0_i32 = arith.constant 0 : i32
    %c0_i32_0 = arith.constant 0 : i32
    %c0_i32_1 = arith.constant 0 : i32
    %c0_i32_2 = arith.constant 0 : i32
    return %c0_i32, %c0_i32_0, %c0_i32_1 : i32, i32, i32
  }
  func.func @transform_9(%arg0: i32) -> (i32, i32, i32) {
    %c0_i32 = arith.constant 0 : i32
    %c0_i32_0 = arith.constant 0 : i32
    %c0_i32_1 = arith.constant 0 : i32
    %c0_i32_2 = arith.constant 0 : i32
    return %c0_i32, %c0_i32_0, %c0_i32_1 : i32, i32, i32
  }
  func.func @transform_10(%arg0: i32) -> (i32, i32, i32) {
    %c0_i32 = arith.constant 0 : i32
    %c0_i32_0 = arith.constant 0 : i32
    %c0_i32_1 = arith.constant 0 : i32
    %c0_i32_2 = arith.constant 0 : i32
    return %c0_i32, %c0_i32_0, %c0_i32_1 : i32, i32, i32
  }
  func.func @transform_11(%arg0: i32) -> (i32, i32, i32) {
    %c0_i32 = arith.constant 0 : i32
    %c0_i32_0 = arith.constant 0 : i32
    %c0_i32_1 = arith.constant 0 : i32
    %c0_i32_2 = arith.constant 0 : i32
    return %c0_i32, %c0_i32_0, %c0_i32_1 : i32, i32, i32
  }
  func.func @transform_12(%arg0: i32) -> (i32, i32, i32) {
    %c0_i32 = arith.constant 0 : i32
    %c0_i32_0 = arith.constant 0 : i32
    %c0_i32_1 = arith.constant 0 : i32
    %c0_i32_2 = arith.constant 0 : i32
    return %c0_i32, %c0_i32_0, %c0_i32_1 : i32, i32, i32
  }
  func.func @transform_13(%arg0: i32) -> (i32, i32, i32) {
    %c0_i32 = arith.constant 0 : i32
    %c0_i32_0 = arith.constant 0 : i32
    %c0_i32_1 = arith.constant 0 : i32
    %c0_i32_2 = arith.constant 0 : i32
    return %c0_i32, %c0_i32_0, %c0_i32_1 : i32, i32, i32
  }
  func.func @transform_14(%arg0: i32) -> (i32, i32, i32) {
    %c0_i32 = arith.constant 0 : i32
    %c0_i32_0 = arith.constant 0 : i32
    %c0_i32_1 = arith.constant 0 : i32
    %c0_i32_2 = arith.constant 0 : i32
    return %c0_i32, %c0_i32_0, %c0_i32_1 : i32, i32, i32
  }
  func.func @transform_15(%arg0: i32) -> (i32, i32, i32) {
    %c0_i32 = arith.constant 0 : i32
    %c0_i32_0 = arith.constant 0 : i32
    %c0_i32_1 = arith.constant 0 : i32
    %c0_i32_2 = arith.constant 0 : i32
    return %c0_i32, %c0_i32_0, %c0_i32_1 : i32, i32, i32
  }
  func.func @transform_16(%arg0: i32) -> (i32, i32) {
    %c0_i32 = arith.constant 0 : i32
    %c0_i32_0 = arith.constant 0 : i32
    %c0_i32_1 = arith.constant 0 : i32
    return %c0_i32, %c0_i32_0 : i32, i32
  }
  func.func @transform_17(%arg0: i32) -> (i32, i32) {
    %c0_i32 = arith.constant 0 : i32
    %c0_i32_0 = arith.constant 0 : i32
    %c0_i32_1 = arith.constant 0 : i32
    return %c0_i32, %c0_i32_0 : i32, i32
  }
  func.func @transform_18(%arg0: i32) -> (i32, i32) {
    %c0_i32 = arith.constant 0 : i32
    %c0_i32_0 = arith.constant 0 : i32
    return %arg0, %c0_i32 : i32, i32
  }
}

</mosaic_0001>

<llo_original>
// kernel: tpu_custom_call.1
$region0: #{tpu_custom_call.1}
  #allocation0 [shape = 'u32[]', space=smem, size = 0x4, offset = 0x4, fixed_abs, tag = 'smem constant byte address 0x4 - core index']
  #allocation1 [shape = 'u32[72,128]{1,0:T(1,128)}', space=vmem, size = 0x9000, scoped, tag = 'internal scratch']
  %s0 = inlined_call_operand.vmem [shape: f32[16,4], index: 0, kind: input, shape index: {}]
  %s1 = inlined_call_operand.vmem [shape: f32[8,8], index: 1, kind: input, shape index: {}]
  %s2 = inlined_call_operand.vmem [shape: f32[4,32], index: 2, kind: input, shape index: {}]
  %s3 = inlined_call_operand.vmem [shape: f32[8,32], index: 3, kind: input, shape index: {}]
  %s4 = inlined_call_operand.vmem [shape: f32[2,96,32], index: 4, kind: input, shape index: {}]
  %s5 = inlined_call_operand.vmem [shape: f32[2,96,1], index: 5, kind: input, shape index: {}]
  %s6 = inlined_call_operand.vmem [shape: f32[2,32,32], index: 6, kind: input, shape index: {}]
  %s7 = inlined_call_operand.vmem [shape: f32[2,1,32], index: 7, kind: input, shape index: {}]
  %s8 = inlined_call_operand.vmem [shape: f32[2,1,32], index: 8, kind: input, shape index: {}]
  %s9 = inlined_call_operand.vmem [shape: f32[2,1,32], index: 9, kind: input, shape index: {}]
  %s10 = inlined_call_operand.vmem [shape: f32[2,32,128], index: 10, kind: input, shape index: {}]
  %s11 = inlined_call_operand.vmem [shape: f32[2,1,128], index: 11, kind: input, shape index: {}]
  %s12 = inlined_call_operand.vmem [shape: f32[2,128,32], index: 12, kind: input, shape index: {}]
  %s13 = inlined_call_operand.vmem [shape: f32[2,1,32], index: 13, kind: input, shape index: {}]
  %s14 = inlined_call_operand.vmem [shape: f32[2,1,32], index: 14, kind: input, shape index: {}]
  %s15 = inlined_call_operand.vmem [shape: f32[2,1,32], index: 15, kind: input, shape index: {}]
  %s16 = inlined_call_operand.vmem [shape: f32[32,128], index: 16, kind: input, shape index: {}]
  %s17 = inlined_call_operand.vmem [shape: f32[1,128], index: 17, kind: input, shape index: {}]
  %s18 = inlined_call_operand.hbm [shape: f32[16,128], index: 18, kind: output, shape index: {}]
  %s19 = sld [smem:[#allocation0]]
  $region105: #{tpu_custom_call.1} parent=0
    _
  %s21 = ssub.s32 1, %s19
  %s22 = scalar_select 0, %s21, %s19
  $region1: #{tpu_custom_call.1} parent=0
    #allocation2 [shape = 'u8[8192]{0}', space=vmem, size = 0x2000, scoped, tag = 'output window, operand 0']
    #allocation3 [shape = 's32[2]{0}', space=sflag, size = 0x8, scoped, tag = 'scoped memory for tpu_custom_call.1']
    %23 = vsyncpa [#allocation3], 0
    %s24 = scalar_lea.sflag [#allocation3], 1
    %25 = vsyncpa %s24, 0
    loop: start=0, step=1, limit=4
    $region2: #{tpu_custom_call.1} parent=1 // loop_pre_header
      _
    $region3: #{tpu_custom_call.1} parent=1 // loop_header
      %s27 = sphi 0, %s31
      %p28 = scmp.ge.s32.totalorder %s27, 4
      %s37 = sphi 0, %s39
      %s40 = sphi 0, %s37
      %s41 = sphi 0, %s40
      %s57 = sphi 0, %s41
      %s61 = sphi 0, %s61
      %s63 = sphi 0, %s61
      %s64 = sphi 0, %s63
      %s78 = sphi 0, %s64
      %s82 = sphi 0, %s82
      %s84 = sphi 0, %s82
      %s85 = sphi 0, %s84
      %s99 = sphi 0, %s85
      %s103 = sphi 0, %s103
      %s105 = sphi 0, %s103
      %s106 = sphi 0, %s105
      %s120 = sphi 0, %s106
      %s124 = sphi 0, %s124
      %s126 = sphi 0, %s124
      %s127 = sphi 0, %s126
      %s141 = sphi 0, %s127
      %s145 = sphi 0, %s145
      %s147 = sphi 0, %s145
      %s148 = sphi 0, %s147
      %s162 = sphi 0, %s148
      %s166 = sphi 0, %s166
      %s168 = sphi 0, %s166
      %s169 = sphi 0, %s168
      %s183 = sphi 0, %s169
      %s187 = sphi 0, %s187
      %s189 = sphi 0, %s187
      %s190 = sphi 0, %s189
      %s204 = sphi 0, %s190
      %s208 = sphi 0, %s208
      %s210 = sphi 0, %s208
      %s211 = sphi 0, %s210
      %s225 = sphi 0, %s211
      %s229 = sphi 0, %s229
      %s231 = sphi 0, %s229
      %s232 = sphi 0, %s231
      %s246 = sphi 0, %s232
      %s250 = sphi 0, %s250
      %s252 = sphi 0, %s250
      %s253 = sphi 0, %s252
      %s267 = sphi 0, %s253
      %s271 = sphi 0, %s271
      %s273 = sphi 0, %s271
      %s274 = sphi 0, %s273
      %s288 = sphi 0, %s274
      %s292 = sphi 0, %s292
      %s294 = sphi 0, %s292
      %s295 = sphi 0, %s294
      %s309 = sphi 0, %s295
      %s313 = sphi 0, %s313
      %s315 = sphi 0, %s313
      %s316 = sphi 0, %s315
      %s330 = sphi 0, %s316
      %s334 = sphi 0, %s334
      %s336 = sphi 0, %s334
      %s337 = sphi 0, %s336
      %s351 = sphi 0, %s337
      %s355 = sphi 0, %s355
      %s357 = sphi 0, %s355
      %s358 = sphi 0, %s357
      %s372 = sphi 0, %s358
      %s376 = sphi 0, %s376
      %s378 = sphi 0, %s376
      %s379 = sphi 0, %s378
      %s393 = sphi 0, %s379
      %s397 = sphi 0, %s397
      %s399 = sphi 0, %s397
      %s400 = sphi 0, %s399
      %s414 = sphi 0, %s400
      %s420 = sphi 0, %s422
      %s423 = sphi 0, %s420
      %s424 = sphi 0, %s423
      %s440 = sphi 0, %s424
    $region4: #{tpu_custom_call.1} parent=1 // loop_header_branch
      %30 = sbr.rel (%p28) target = $region8
    $region5: #{tpu_custom_call.1} parent=1 // loop_body
      %s32 = ssub.s32 %s27, 1
      %s33 = ssub.s32 %s27, 2
      %s34 = sadd.s32 %s27, 1
      %s35 = ssub.s32 %s27, %s34
      %p36 = scmp.eq.s32.totalorder %s35, 0
      %s38 = sadd.s32 %s37, 1
      %s39 = scalar_select %p36, %s37, %s38
      %p42 = pneg %p36
      %p43 = scmp.eq.s32.totalorder %s27, 1
      %p44 = por %p42, %p43
      %p45 = scmp.ne.s32.totalorder %s37, %s40
      %p46 = scmp.eq.s32.totalorder %s27, 0
      %p47 = por %p45, %p46
      %p48 = scmp.ne.s32.totalorder %s37, %s40
      %p49 = scmp.eq.s32.totalorder %s32, 1
      %p50 = por %p48, %p49
      %p51 = scmp.ne.s32.totalorder %s40, %s41
      %p52 = scmp.eq.s32.totalorder %s32, 0
      %p53 = por %p51, %p52
      %p54 = scmp.ne.s32.totalorder %s40, %s41
      %p55 = scmp.eq.s32.totalorder %s33, 1
      %p56 = por %p54, %p55
      %p58 = scmp.ne.s32.totalorder %s41, %s57
      %p59 = scmp.eq.s32.totalorder %s33, 0
      %p60 = por %p58, %p59
      %s62 = sadd.s32 %s61, 1
      %p65 = scmp.eq.s32.totalorder %s27, 1
      %p66 = scmp.ne.s32.totalorder %s61, %s63
      %p67 = scmp.eq.s32.totalorder %s27, 0
      %p68 = por %p66, %p67
      %p69 = scmp.ne.s32.totalorder %s61, %s63
      %p70 = scmp.eq.s32.totalorder %s32, 1
      %p71 = por %p69, %p70
      %p72 = scmp.ne.s32.totalorder %s63, %s64
      %p73 = scmp.eq.s32.totalorder %s32, 0
      %p74 = por %p72, %p73
      %p75 = scmp.ne.s32.totalorder %s63, %s64
      %p76 = scmp.eq.s32.totalorder %s33, 1
      %p77 = por %p75, %p76
      %p79 = scmp.ne.s32.totalorder %s64, %s78
      %p80 = scmp.eq.s32.totalorder %s33, 0
      %p81 = por %p79, %p80
      %s83 = sadd.s32 %s82, 1
      %p86 = scmp.eq.s32.totalorder %s27, 1
      %p87 = scmp.ne.s32.totalorder %s82, %s84
      %p88 = scmp.eq.s32.totalorder %s27, 0
      %p89 = por %p87, %p88
      %p90 = scmp.ne.s32.totalorder %s82, %s84
      %p91 = scmp.eq.s32.totalorder %s32, 1
      %p92 = por %p90, %p91
      %p93 = scmp.ne.s32.totalorder %s84, %s85
      %p94 = scmp.eq.s32.totalorder %s32, 0
      %p95 = por %p93, %p94
      %p96 = scmp.ne.s32.totalorder %s84, %s85
      %p97 = scmp.eq.s32.totalorder %s33, 1
      %p98 = por %p96, %p97
      %p100 = scmp.ne.s32.totalorder %s85, %s99
      %p101 = scmp.eq.s32.totalorder %s33, 0
      %p102 = por %p100, %p101
      %s104 = sadd.s32 %s103, 1
      %p107 = scmp.eq.s32.totalorder %s27, 1
      %p108 = scmp.ne.s32.totalorder %s103, %s105
      %p109 = scmp.eq.s32.totalorder %s27, 0
      %p110 = por %p108, %p109
      %p111 = scmp.ne.s32.totalorder %s103, %s105
      %p112 = scmp.eq.s32.totalorder %s32, 1
      %p113 = por %p111, %p112
      %p114 = scmp.ne.s32.totalorder %s105, %s106
      %p115 = scmp.eq.s32.totalorder %s32, 0
      %p116 = por %p114, %p115
      %p117 = scmp.ne.s32.totalorder %s105, %s106
      %p118 = scmp.eq.s32.totalorder %s33, 1
      %p119 = por %p117, %p118
      %p121 = scmp.ne.s32.totalorder %s106, %s120
      %p122 = scmp.eq.s32.totalorder %s33, 0
      %p123 = por %p121, %p122
      %s125 = sadd.s32 %s124, 1
      %p128 = scmp.eq.s32.totalorder %s27, 1
      %p129 = scmp.ne.s32.totalorder %s124, %s126
      %p130 = scmp.eq.s32.totalorder %s27, 0
      %p131 = por %p129, %p130
      %p132 = scmp.ne.s32.totalorder %s124, %s126
      %p133 = scmp.eq.s32.totalorder %s32, 1
      %p134 = por %p132, %p133
      %p135 = scmp.ne.s32.totalorder %s126, %s127
      %p136 = scmp.eq.s32.totalorder %s32, 0
      %p137 = por %p135, %p136
      %p138 = scmp.ne.s32.totalorder %s126, %s127
      %p139 = scmp.eq.s32.totalorder %s33, 1
      %p140 = por %p138, %p139
      %p142 = scmp.ne.s32.totalorder %s127, %s141
      %p143 = scmp.eq.s32.totalorder %s33, 0
      %p144 = por %p142, %p143
      %s146 = sadd.s32 %s145, 1
      %p149 = scmp.eq.s32.totalorder %s27, 1
      %p150 = scmp.ne.s32.totalorder %s145, %s147
      %p151 = scmp.eq.s32.totalorder %s27, 0
      %p152 = por %p150, %p151
      %p153 = scmp.ne.s32.totalorder %s145, %s147
      %p154 = scmp.eq.s32.totalorder %s32, 1
      %p155 = por %p153, %p154
      %p156 = scmp.ne.s32.totalorder %s147, %s148
      %p157 = scmp.eq.s32.totalorder %s32, 0
      %p158 = por %p156, %p157
      %p159 = scmp.ne.s32.totalorder %s147, %s148
      %p160 = scmp.eq.s32.totalorder %s33, 1
      %p161 = por %p159, %p160
      %p163 = scmp.ne.s32.totalorder %s148, %s162
      %p164 = scmp.eq.s32.totalorder %s33, 0
      %p165 = por %p163, %p164
      %s167 = sadd.s32 %s166, 1
      %p170 = scmp.eq.s32.totalorder %s27, 1
      %p171 = scmp.ne.s32.totalorder %s166, %s168
      %p172 = scmp.eq.s32.totalorder %s27, 0
      %p173 = por %p171, %p172
      %p174 = scmp.ne.s32.totalorder %s166, %s168
      %p175 = scmp.eq.s32.totalorder %s32, 1
      %p176 = por %p174, %p175
      %p177 = scmp.ne.s32.totalorder %s168, %s169
      %p178 = scmp.eq.s32.totalorder %s32, 0
      %p179 = por %p177, %p178
      %p180 = scmp.ne.s32.totalorder %s168, %s169
      %p181 = scmp.eq.s32.totalorder %s33, 1
      %p182 = por %p180, %p181
      %p184 = scmp.ne.s32.totalorder %s169, %s183
      %p185 = scmp.eq.s32.totalorder %s33, 0
      %p186 = por %p184, %p185
      %s188 = sadd.s32 %s187, 1
      %p191 = scmp.eq.s32.totalorder %s27, 1
      %p192 = scmp.ne.s32.totalorder %s187, %s189
      %p193 = scmp.eq.s32.totalorder %s27, 0
      %p194 = por %p192, %p193
      %p195 = scmp.ne.s32.totalorder %s187, %s189
      %p196 = scmp.eq.s32.totalorder %s32, 1
      %p197 = por %p195, %p196
      %p198 = scmp.ne.s32.totalorder %s189, %s190
      %p199 = scmp.eq.s32.totalorder %s32, 0
      %p200 = por %p198, %p199
      %p201 = scmp.ne.s32.totalorder %s189, %s190
      %p202 = scmp.eq.s32.totalorder %s33, 1
      %p203 = por %p201, %p202
      %p205 = scmp.ne.s32.totalorder %s190, %s204
      %p206 = scmp.eq.s32.totalorder %s33, 0
      %p207 = por %p205, %p206
      %s209 = sadd.s32 %s208, 1
      %p212 = scmp.eq.s32.totalorder %s27, 1
      %p213 = scmp.ne.s32.totalorder %s208, %s210
      %p214 = scmp.eq.s32.totalorder %s27, 0
      %p215 = por %p213, %p214
      %p216 = scmp.ne.s32.totalorder %s208, %s210
      %p217 = scmp.eq.s32.totalorder %s32, 1
      %p218 = por %p216, %p217
      %p219 = scmp.ne.s32.totalorder %s210, %s211
      %p220 = scmp.eq.s32.totalorder %s32, 0
      %p221 = por %p219, %p220
      %p222 = scmp.ne.s32.totalorder %s210, %s211
      %p223 = scmp.eq.s32.totalorder %s33, 1
      %p224 = por %p222, %p223
      %p226 = scmp.ne.s32.totalorder %s211, %s225
      %p227 = scmp.eq.s32.totalorder %s33, 0
      %p228 = por %p226, %p227
      %s230 = sadd.s32 %s229, 1
      %p233 = scmp.eq.s32.totalorder %s27, 1
      %p234 = scmp.ne.s32.totalorder %s229, %s231
      %p235 = scmp.eq.s32.totalorder %s27, 0
      %p236 = por %p234, %p235
      %p237 = scmp.ne.s32.totalorder %s229, %s231
      %p238 = scmp.eq.s32.totalorder %s32, 1
      %p239 = por %p237, %p238
      %p240 = scmp.ne.s32.totalorder %s231, %s232
      %p241 = scmp.eq.s32.totalorder %s32, 0
      %p242 = por %p240, %p241
      %p243 = scmp.ne.s32.totalorder %s231, %s232
      %p244 = scmp.eq.s32.totalorder %s33, 1
      %p245 = por %p243, %p244
      %p247 = scmp.ne.s32.totalorder %s232, %s246
      %p248 = scmp.eq.s32.totalorder %s33, 0
      %p249 = por %p247, %p248
      %s251 = sadd.s32 %s250, 1
      %p254 = scmp.eq.s32.totalorder %s27, 1
      %p255 = scmp.ne.s32.totalorder %s250, %s252
      %p256 = scmp.eq.s32.totalorder %s27, 0
      %p257 = por %p255, %p256
      %p258 = scmp.ne.s32.totalorder %s250, %s252
      %p259 = scmp.eq.s32.totalorder %s32, 1
      %p260 = por %p258, %p259
      %p261 = scmp.ne.s32.totalorder %s252, %s253
      %p262 = scmp.eq.s32.totalorder %s32, 0
      %p263 = por %p261, %p262
      %p264 = scmp.ne.s32.totalorder %s252, %s253
      %p265 = scmp.eq.s32.totalorder %s33, 1
      %p266 = por %p264, %p265
      %p268 = scmp.ne.s32.totalorder %s253, %s267
      %p269 = scmp.eq.s32.totalorder %s33, 0
      %p270 = por %p268, %p269
      %s272 = sadd.s32 %s271, 1
      %p275 = scmp.eq.s32.totalorder %s27, 1
      %p276 = scmp.ne.s32.totalorder %s271, %s273
      %p277 = scmp.eq.s32.totalorder %s27, 0
      %p278 = por %p276, %p277
      %p279 = scmp.ne.s32.totalorder %s271, %s273
      %p280 = scmp.eq.s32.totalorder %s32, 1
      %p281 = por %p279, %p280
      %p282 = scmp.ne.s32.totalorder %s273, %s274
      %p283 = scmp.eq.s32.totalorder %s32, 0
      %p284 = por %p282, %p283
      %p285 = scmp.ne.s32.totalorder %s273, %s274
      %p286 = scmp.eq.s32.totalorder %s33, 1
      %p287 = por %p285, %p286
      %p289 = scmp.ne.s32.totalorder %s274, %s288
      %p290 = scmp.eq.s32.totalorder %s33, 0
      %p291 = por %p289, %p290
      %s293 = sadd.s32 %s292, 1
      %p296 = scmp.eq.s32.totalorder %s27, 1
      %p297 = scmp.ne.s32.totalorder %s292, %s294
      %p298 = scmp.eq.s32.totalorder %s27, 0
      %p299 = por %p297, %p298
      %p300 = scmp.ne.s32.totalorder %s292, %s294
      %p301 = scmp.eq.s32.totalorder %s32, 1
      %p302 = por %p300, %p301
      %p303 = scmp.ne.s32.totalorder %s294, %s295
      %p304 = scmp.eq.s32.totalorder %s32, 0
      %p305 = por %p303, %p304
      %p306 = scmp.ne.s32.totalorder %s294, %s295
      %p307 = scmp.eq.s32.totalorder %s33, 1
      %p308 = por %p306, %p307
      %p310 = scmp.ne.s32.totalorder %s295, %s309
      %p311 = scmp.eq.s32.totalorder %s33, 0
      %p312 = por %p310, %p311
      %s314 = sadd.s32 %s313, 1
      %p317 = scmp.eq.s32.totalorder %s27, 1
      %p318 = scmp.ne.s32.totalorder %s313, %s315
      %p319 = scmp.eq.s32.totalorder %s27, 0
      %p320 = por %p318, %p319
      %p321 = scmp.ne.s32.totalorder %s313, %s315
      %p322 = scmp.eq.s32.totalorder %s32, 1
      %p323 = por %p321, %p322
      %p324 = scmp.ne.s32.totalorder %s315, %s316
      %p325 = scmp.eq.s32.totalorder %s32, 0
      %p326 = por %p324, %p325
      %p327 = scmp.ne.s32.totalorder %s315, %s316
      %p328 = scmp.eq.s32.totalorder %s33, 1
      %p329 = por %p327, %p328
      %p331 = scmp.ne.s32.totalorder %s316, %s330
      %p332 = scmp.eq.s32.totalorder %s33, 0
      %p333 = por %p331, %p332
      %s335 = sadd.s32 %s334, 1
      %p338 = scmp.eq.s32.totalorder %s27, 1
      %p339 = scmp.ne.s32.totalorder %s334, %s336
      %p340 = scmp.eq.s32.totalorder %s27, 0
      %p341 = por %p339, %p340
      %p342 = scmp.ne.s32.totalorder %s334, %s336
      %p343 = scmp.eq.s32.totalorder %s32, 1
      %p344 = por %p342, %p343
      %p345 = scmp.ne.s32.totalorder %s336, %s337
      %p346 = scmp.eq.s32.totalorder %s32, 0
      %p347 = por %p345, %p346
      %p348 = scmp.ne.s32.totalorder %s336, %s337
      %p349 = scmp.eq.s32.totalorder %s33, 1
      %p350 = por %p348, %p349
      %p352 = scmp.ne.s32.totalorder %s337, %s351
      %p353 = scmp.eq.s32.totalorder %s33, 0
      %p354 = por %p352, %p353
      %s356 = sadd.s32 %s355, 1
      %p359 = scmp.eq.s32.totalorder %s27, 1
      %p360 = scmp.ne.s32.totalorder %s355, %s357
      %p361 = scmp.eq.s32.totalorder %s27, 0
      %p362 = por %p360, %p361
      %p363 = scmp.ne.s32.totalorder %s355, %s357
      %p364 = scmp.eq.s32.totalorder %s32, 1
      %p365 = por %p363, %p364
      %p366 = scmp.ne.s32.totalorder %s357, %s358
      %p367 = scmp.eq.s32.totalorder %s32, 0
      %p368 = por %p366, %p367
      %p369 = scmp.ne.s32.totalorder %s357, %s358
      %p370 = scmp.eq.s32.totalorder %s33, 1
      %p371 = por %p369, %p370
      %p373 = scmp.ne.s32.totalorder %s358, %s372
      %p374 = scmp.eq.s32.totalorder %s33, 0
      %p375 = por %p373, %p374
      %s377 = sadd.s32 %s376, 1
      %p380 = scmp.eq.s32.totalorder %s27, 1
      %p381 = scmp.ne.s32.totalorder %s376, %s378
      %p382 = scmp.eq.s32.totalorder %s27, 0
      %p383 = por %p381, %p382
      %p384 = scmp.ne.s32.totalorder %s376, %s378
      %p385 = scmp.eq.s32.totalorder %s32, 1
      %p386 = por %p384, %p385
      %p387 = scmp.ne.s32.totalorder %s378, %s379
      %p388 = scmp.eq.s32.totalorder %s32, 0
      %p389 = por %p387, %p388
      %p390 = scmp.ne.s32.totalorder %s378, %s379
      %p391 = scmp.eq.s32.totalorder %s33, 1
      %p392 = por %p390, %p391
      %p394 = scmp.ne.s32.totalorder %s379, %s393
      %p395 = scmp.eq.s32.totalorder %s33, 0
      %p396 = por %p394, %p395
      %s398 = sadd.s32 %s397, 1
      %p401 = scmp.eq.s32.totalorder %s27, 1
      %p402 = scmp.ne.s32.totalorder %s397, %s399
      %p403 = scmp.eq.s32.totalorder %s27, 0
      %p404 = por %p402, %p403
      %p405 = scmp.ne.s32.totalorder %s397, %s399
      %p406 = scmp.eq.s32.totalorder %s32, 1
      %p407 = por %p405, %p406
      %p408 = scmp.ne.s32.totalorder %s399, %s400
      %p409 = scmp.eq.s32.totalorder %s32, 0
      %p410 = por %p408, %p409
      %p411 = scmp.ne.s32.totalorder %s399, %s400
      %p412 = scmp.eq.s32.totalorder %s33, 1
      %p413 = por %p411, %p412
      %p415 = scmp.ne.s32.totalorder %s400, %s414
      %p416 = scmp.eq.s32.totalorder %s33, 0
      %p417 = por %p415, %p416
      %s418 = ssub.s32 %s27, %s34
      %p419 = scmp.eq.s32.totalorder %s418, 0
      %s421 = sadd.s32 %s420, 1
      %s422 = scalar_select %p419, %s420, %s421
      %p425 = pneg %p419
      %p426 = scmp.eq.s32.totalorder %s27, 1
      %p427 = por %p425, %p426
      %p428 = scmp.ne.s32.totalorder %s420, %s423
      %p429 = scmp.eq.s32.totalorder %s27, 0
      %p430 = por %p428, %p429
      %p431 = scmp.ne.s32.totalorder %s420, %s423
      %p432 = scmp.eq.s32.totalorder %s32, 1
      %p433 = por %p431, %p432
      %p434 = scmp.ne.s32.totalorder %s423, %s424
      %p435 = scmp.eq.s32.totalorder %s32, 0
      %p436 = por %p434, %p435
      %p437 = scmp.ne.s32.totalorder %s423, %s424
      %p438 = scmp.eq.s32.totalorder %s33, 1
      %p439 = por %p437, %p438
      %p441 = scmp.ne.s32.totalorder %s424, %s440
      %p442 = scmp.eq.s32.totalorder %s33, 0
      %p443 = por %p441, %p442
      %p444 = scmp.le.s32.totalorder 1, %s27
      %p445 = scmp.lt.s32.totalorder %s27, 3
      %p446 = pnand %p444, %p445
      %p447 = pneg %p446
      // Predicated region
      $region9: #{tpu_custom_call.1} parent=5 // pred_check
        _
      $region10: #{tpu_custom_call.1} parent=5 // pred_check_branch
        %449 = sbr.rel (%p446) target = $region12
      $region11: #{tpu_custom_call.1} parent=5 // pred_region
        %s450 = ssub.s32 %s27, 1
        // Predicated region
        $region13: #{tpu_custom_call.1} parent=11 // pred_check
          %p451 = pneg %p74
        $region14: #{tpu_custom_call.1} parent=11 // pred_check_branch
          %453 = sbr.rel (%p451) target = $region16
        $region15: #{tpu_custom_call.1} parent=11 // pred_region
          _
        $region16: #{tpu_custom_call.1} parent=11 // pred_fallthru
          _
        // Predicated region
        $region17: #{tpu_custom_call.1} parent=11 // pred_check
          %p454 = pneg %p95
        $region18: #{tpu_custom_call.1} parent=11 // pred_check_branch
          %456 = sbr.rel (%p454) target = $region20
        $region19: #{tpu_custom_call.1} parent=11 // pred_region
          _
        $region20: #{tpu_custom_call.1} parent=11 // pred_fallthru
          _
        // Predicated region
        $region21: #{tpu_custom_call.1} parent=11 // pred_check
          %p457 = pneg %p116
        $region22: #{tpu_custom_call.1} parent=11 // pred_check_branch
          %459 = sbr.rel (%p457) target = $region24
        $region23: #{tpu_custom_call.1} parent=11 // pred_region
          _
        $region24: #{tpu_custom_call.1} parent=11 // pred_fallthru
          _
        // Predicated region
        $region25: #{tpu_custom_call.1} parent=11 // pred_check
          %p460 = pneg %p137
        $region26: #{tpu_custom_call.1} parent=11 // pred_check_branch
          %462 = sbr.rel (%p460) target = $region28
        $region27: #{tpu_custom_call.1} parent=11 // pred_region
          _
        $region28: #{tpu_custom_call.1} parent=11 // pred_fallthru
          _
        // Predicated region
        $region29: #{tpu_custom_call.1} parent=11 // pred_check
          %p463 = pneg %p158
        $region30: #{tpu_custom_call.1} parent=11 // pred_check_branch
          %465 = sbr.rel (%p463) target = $region32
        $region31: #{tpu_custom_call.1} parent=11 // pred_region
          _
        $region32: #{tpu_custom_call.1} parent=11 // pred_fallthru
          _
        // Predicated region
        $region33: #{tpu_custom_call.1} parent=11 // pred_check
          %p466 = pneg %p179
        $region34: #{tpu_custom_call.1} parent=11 // pred_check_branch
          %468 = sbr.rel (%p466) target = $region36
        $region35: #{tpu_custom_call.1} parent=11 // pred_region
          _
        $region36: #{tpu_custom_call.1} parent=11 // pred_fallthru
          _
        // Predicated region
        $region37: #{tpu_custom_call.1} parent=11 // pred_check
          %p469 = pneg %p200
        $region38: #{tpu_custom_call.1} parent=11 // pred_check_branch
          %471 = sbr.rel (%p469) target = $region40
        $region39: #{tpu_custom_call.1} parent=11 // pred_region
          _
        $region40: #{tpu_custom_call.1} parent=11 // pred_fallthru
          _
        // Predicated region
        $region41: #{tpu_custom_call.1} parent=11 // pred_check
          %p472 = pneg %p221
        $region42: #{tpu_custom_call.1} parent=11 // pred_check_branch
          %474 = sbr.rel (%p472) target = $region44
        $region43: #{tpu_custom_call.1} parent=11 // pred_region
          _
        $region44: #{tpu_custom_call.1} parent=11 // pred_fallthru
          _
        // Predicated region
        $region45: #{tpu_custom_call.1} parent=11 // pred_check
          %p475 = pneg %p242
        $region46: #{tpu_custom_call.1} parent=11 // pred_check_branch
          %477 = sbr.rel (%p475) target = $region48
        $region47: #{tpu_custom_call.1} parent=11 // pred_region
          _
        $region48: #{tpu_custom_call.1} parent=11 // pred_fallthru
          _
        // Predicated region
        $region49: #{tpu_custom_call.1} parent=11 // pred_check
          %p478 = pneg %p263
        $region50: #{tpu_custom_call.1} parent=11 // pred_check_branch
          %480 = sbr.rel (%p478) target = $region52
        $region51: #{tpu_custom_call.1} parent=11 // pred_region
          _
        $region52: #{tpu_custom_call.1} parent=11 // pred_fallthru
          _
        // Predicated region
        $region53: #{tpu_custom_call.1} parent=11 // pred_check
          %p481 = pneg %p284
        $region54: #{tpu_custom_call.1} parent=11 // pred_check_branch
          %483 = sbr.rel (%p481) target = $region56
        $region55: #{tpu_custom_call.1} parent=11 // pred_region
          _
        $region56: #{tpu_custom_call.1} parent=11 // pred_fallthru
          _
        // Predicated region
        $region57: #{tpu_custom_call.1} parent=11 // pred_check
          %p484 = pneg %p305
        $region58: #{tpu_custom_call.1} parent=11 // pred_check_branch
          %486 = sbr.rel (%p484) target = $region60
        $region59: #{tpu_custom_call.1} parent=11 // pred_region
          _
        $region60: #{tpu_custom_call.1} parent=11 // pred_fallthru
          _
        // Predicated region
        $region61: #{tpu_custom_call.1} parent=11 // pred_check
          %p487 = pneg %p326
        $region62: #{tpu_custom_call.1} parent=11 // pred_check_branch
          %489 = sbr.rel (%p487) target = $region64
        $region63: #{tpu_custom_call.1} parent=11 // pred_region
          _
        $region64: #{tpu_custom_call.1} parent=11 // pred_fallthru
          _
        // Predicated region
        $region65: #{tpu_custom_call.1} parent=11 // pred_check
          %p490 = pneg %p347
        $region66: #{tpu_custom_call.1} parent=11 // pred_check_branch
          %492 = sbr.rel (%p490) target = $region68
        $region67: #{tpu_custom_call.1} parent=11 // pred_region
          _
        $region68: #{tpu_custom_call.1} parent=11 // pred_fallthru
          _
        // Predicated region
        $region69: #{tpu_custom_call.1} parent=11 // pred_check
          %p493 = pneg %p368
        $region70: #{tpu_custom_call.1} parent=11 // pred_check_branch
          %495 = sbr.rel (%p493) target = $region72
        $region71: #{tpu_custom_call.1} parent=11 // pred_region
          _
        $region72: #{tpu_custom_call.1} parent=11 // pred_fallthru
          _
        // Predicated region
        $region73: #{tpu_custom_call.1} parent=11 // pred_check
          %p496 = pneg %p389
        $region74: #{tpu_custom_call.1} parent=11 // pred_check_branch
          %498 = sbr.rel (%p496) target = $region76
        $region75: #{tpu_custom_call.1} parent=11 // pred_region
          _
        $region76: #{tpu_custom_call.1} parent=11 // pred_fallthru
          _
        // Predicated region
        $region77: #{tpu_custom_call.1} parent=11 // pred_check
          %p499 = pneg %p410
        $region78: #{tpu_custom_call.1} parent=11 // pred_check_branch
          %501 = sbr.rel (%p499) target = $region80
        $region79: #{tpu_custom_call.1} parent=11 // pred_region
          _
        $region80: #{tpu_custom_call.1} parent=11 // pred_fallthru
          _
      $region12: #{tpu_custom_call.1} parent=5 // pred_fallthru
        _
      %p502 = scmp.lt.s32.totalorder %s27, 2
      // Predicated region
      $region81: #{tpu_custom_call.1} parent=5 // pred_check
        %p503 = pneg %p502
      $region82: #{tpu_custom_call.1} parent=5 // pred_check_branch
        %505 = sbr.rel (%p503) target = $region84
      $region83: #{tpu_custom_call.1} parent=5 // pred_region
        // Predicated region
        $region85: #{tpu_custom_call.1} parent=83 // pred_check
          %p506 = pneg %p47
        $region86: #{tpu_custom_call.1} parent=83 // pred_check_branch
          %508 = sbr.rel (%p506) target = $region88
        $region87: #{tpu_custom_call.1} parent=83 // pred_region
          %p509 = scmp.lt.s32.totalorder %s27, 1
          %s510 = scalar_select %p509, %s27, 1
          %s511 = smul.addr %s510, 8
          %s512 = scalar_lea.vmem %s0, %s511
        $region88: #{tpu_custom_call.1} parent=83 // pred_fallthru
          _
      $region84: #{tpu_custom_call.1} parent=5 // pred_fallthru
        _
      %p513 = scmp.le.s32.totalorder 1, %s27
      %p514 = scmp.lt.s32.totalorder %s27, 3
      %p515 = pnand %p513, %p514
      %p516 = pneg %p515
      // Predicated region
      $region89: #{tpu_custom_call.1} parent=5 // pred_check
        _
      $region90: #{tpu_custom_call.1} parent=5 // pred_check_branch
        %518 = sbr.rel (%p515) target = $region92
      $region91: #{tpu_custom_call.1} parent=5 // pred_region
        %s519 = ssub.s32 %s27, 1
        %p520 = scmp.lt.s32.totalorder %s32, 1
        %s521 = scalar_select %p520, %s32, 1
        %s522 = smul.addr %s521, 8
        %s523 = scalar_lea.vmem %s0, %s522
        %p524 = pneg %p53
        %p525 = pneg %p50
        %p526 = pneg %p74
        %p527 = pneg %p71
        %p528 = pneg %p95
        %p529 = pneg %p92
        %p530 = pneg %p116
        %p531 = pneg %p113
        %p532 = pneg %p137
        %p533 = pneg %p134
        %p534 = pneg %p158
        %p535 = pneg %p155
        %p536 = pneg %p179
        %p537 = pneg %p176
        %p538 = pneg %p200
        %p539 = pneg %p197
        %p540 = pneg %p221
        %p541 = pneg %p218
        %p542 = pneg %p242
        %p543 = pneg %p239
        %p544 = pneg %p263
        %p545 = pneg %p260
        %p546 = pneg %p284
        %p547 = pneg %p281
        %p548 = pneg %p305
        %p549 = pneg %p302
        %p550 = pneg %p326
        %p551 = pneg %p323
        %p552 = pneg %p347
        %p553 = pneg %p344
        %p554 = pneg %p368
        %p555 = pneg %p365
        %p556 = pneg %p389
        %p557 = pneg %p386
        %p558 = pneg %p410
        %p559 = pneg %p407
        %p560 = pneg %p436
        %p561 = pneg %p433
        %s562 = sand.u32 %s423, 1
        %s563 = scalar_lea.sflag [#allocation3], %s562
        %s564 = sand.u32 %s423, 1
        %s565 = smul.addr %s564, 8
        %s566 = scalar_lea.vmem [#allocation2], %s565
        %p567 = scmp.lt.s32.totalorder %s32, 1
        %s568 = scalar_select %p567, %s32, 1
        %s569 = smul.addr %s568, 8
        %s570 = scalar_lea.vmem %s0, %s569
        %v571 = vld [vmem:[%s570] sm:$0xff]
        %v572 = vld [vmem:[%s2] sm:$0xf]
        %v573 = vld [vmem:[%s3] sm:$0xff]
        %vm574 = vcmask 31744
        %v576 = vsel %vm574, %v571, 0
        %vm578 = vcmask 1043456
        %v580 = vsel %vm578, %v572, 0
        %582 = vmatpush.msra.mxu0 0.0
        %583 = vmatpush.msra.mxu0 0.0
        %584 = vmatpush.msra.mxu0 0.0
        %585 = vmatpush.msra.mxu0 0.0
        %586 = vmatpush.msra.mxu0 0.0
        %587 = vmatpush.msra.mxu0 0.0
        %588 = vmatpush.msra.mxu0 0.0
        %589 = vmatpush.msra.mxu0 0.0
        %590 = vmatpush.msra.mxu0 0.0
        %591 = vmatpush.msra.mxu0 0.0
        %592 = vmatpush.msra.mxu0 0.0
        %593 = vmatpush.msra.mxu0 0.0
        %594 = vmatpush.msra.mxu0 0.0
        %595 = vmatpush.msra.mxu0 0.0
        %596 = vmatpush.msra.mxu0 0.0
        %597 = vmatpush.msra.mxu0 %v580
        %598 = vmatmul.f32.gmra.mxu0 %v576
        %v599 = vpop.f32.mrf.mxu0
        %v600 = vadd.f32 %v573, %v599
        %601 = vdwg.mxu0
        %v602 = vld [vmem:[%s1] sm:$0xff]
        %v603 = vld [vmem:[%s4] sm:$0xff]
        %v604 = vld [vmem:[%s4 + $0x8] sm:$0xff]
        %v605 = vld [vmem:[%s4 + $0x10] sm:$0xff]
        %v606 = vld [vmem:[%s4 + $0x18] sm:$0xff]
        %v607 = vld [vmem:[%s4 + $0x20] sm:$0xff]
        %v608 = vld [vmem:[%s4 + $0x28] sm:$0xff]
        %v609 = vld [vmem:[%s4 + $0x30] sm:$0xff]
        %v610 = vld [vmem:[%s4 + $0x38] sm:$0xff]
        %v611 = vld [vmem:[%s4 + $0x40] sm:$0xff]
        %v612 = vld [vmem:[%s4 + $0x48] sm:$0xff]
        %v613 = vld [vmem:[%s4 + $0x50] sm:$0xff]
        %v614 = vld [vmem:[%s4 + $0x58] sm:$0xff]
        %v615 = vld [vmem:[%s5] sm:$0xff]
        %v616 = vld [vmem:[%s5 + $0x8] sm:$0xff]
        %v617 = vld [vmem:[%s5 + $0x10] sm:$0xff]
        %v618 = vld [vmem:[%s5 + $0x18] sm:$0xff]
        %v619 = vld [vmem:[%s5 + $0x20] sm:$0xff]
        %v620 = vld [vmem:[%s5 + $0x28] sm:$0xff]
        %v621 = vld [vmem:[%s5 + $0x30] sm:$0xff]
        %v622 = vld [vmem:[%s5 + $0x38] sm:$0xff]
        %v623 = vld [vmem:[%s5 + $0x40] sm:$0xff]
        %v624 = vld [vmem:[%s5 + $0x48] sm:$0xff]
        %v625 = vld [vmem:[%s5 + $0x50] sm:$0xff]
        %v626 = vld [vmem:[%s5 + $0x58] sm:$0xff]
        %628 = vset.pattern.permute.xlu0 0
        %629 = vperm.xlu0 %628, %v615
        %v630 = vpop.permute.xlu0 %629
        %633 = vset.pattern.permute.xlu0 0
        %634 = vperm.xlu0 %633, %v616
        %v635 = vpop.permute.xlu0 %634
        %638 = vset.pattern.permute.xlu0 0
        %639 = vperm.xlu0 %638, %v617
        %v640 = vpop.permute.xlu0 %639
        %643 = vset.pattern.permute.xlu0 0
        %644 = vperm.xlu0 %643, %v618
        %v645 = vpop.permute.xlu0 %644
        %648 = vset.pattern.permute.xlu0 0
        %649 = vperm.xlu0 %648, %v619
        %v650 = vpop.permute.xlu0 %649
        %653 = vset.pattern.permute.xlu0 0
        %654 = vperm.xlu0 %653, %v620
        %v655 = vpop.permute.xlu0 %654
        %658 = vset.pattern.permute.xlu0 0
        %659 = vperm.xlu0 %658, %v621
        %v660 = vpop.permute.xlu0 %659
        %663 = vset.pattern.permute.xlu0 0
        %664 = vperm.xlu0 %663, %v622
        %v665 = vpop.permute.xlu0 %664
        %668 = vset.pattern.permute.xlu0 0
        %669 = vperm.xlu0 %668, %v623
        %v670 = vpop.permute.xlu0 %669
        %673 = vset.pattern.permute.xlu0 0
        %674 = vperm.xlu0 %673, %v624
        %v675 = vpop.permute.xlu0 %674
        %678 = vset.pattern.permute.xlu0 0
        %679 = vperm.xlu0 %678, %v625
        %v680 = vpop.permute.xlu0 %679
        %683 = vset.pattern.permute.xlu0 0
        %684 = vperm.xlu0 %683, %v626
        %v685 = vpop.permute.xlu0 %684
        %vm687 = vcmask 261120
        %v689 = vsel %vm687, %v603, 0
        %v692 = vsel %vm687, %v604, 0
        %v695 = vsel %vm687, %v605, 0
        %v698 = vsel %vm687, %v606, 0
        %v701 = vsel %vm687, %v607, 0
        %v704 = vsel %vm687, %v608, 0
        %v707 = vsel %vm687, %v609, 0
        %v710 = vsel %vm687, %v610, 0
        %v713 = vsel %vm687, %v611, 0
        %v716 = vsel %vm687, %v612, 0
        %v719 = vsel %vm687, %v613, 0
        %v722 = vsel %vm687, %v614, 0
        %v725 = vsel %vm687, %v600, 0
        %727 = vmatpush.xpose.msra.mxu0 0.0
        %728 = vmatpush.xpose.msra.mxu0 0.0
        %729 = vmatpush.xpose.msra.mxu0 0.0
        %730 = vmatpush.xpose.msra.mxu0 0.0
        %731 = vmatpush.xpose.msra.mxu0 0.0
        %732 = vmatpush.xpose.msra.mxu0 0.0
        %733 = vmatpush.xpose.msra.mxu0 0.0
        %734 = vmatpush.xpose.msra.mxu0 0.0
        %735 = vmatpush.xpose.msra.mxu0 0.0
        %736 = vmatpush.xpose.msra.mxu0 0.0
        %737 = vmatpush.xpose.msra.mxu0 0.0
        %738 = vmatpush.xpose.msra.mxu0 0.0
        %739 = vmatpush.xpose.msra.mxu0 0.0
        %740 = vmatpush.xpose.msra.mxu0 0.0
        %741 = vmatpush.xpose.msra.mxu0 0.0
        %742 = vmatpush.xpose.msra.mxu0 %v725
        %743 = vmatmul.f32.gmra.mxu0 %v689
        %v744 = vpop.f32.mrf.mxu0
        %v745 = vadd.f32 %v630, %v744
        %746 = vmatmul.f32.gmra.mxu0 %v692
        %v747 = vpop.f32.mrf.mxu0
        %v748 = vadd.f32 %v635, %v747
        %749 = vmatmul.f32.gmra.mxu0 %v695
        %v750 = vpop.f32.mrf.mxu0
        %v751 = vadd.f32 %v640, %v750
        %752 = vmatmul.f32.gmra.mxu0 %v698
        %v753 = vpop.f32.mrf.mxu0
        %v754 = vadd.f32 %v645, %v753
        %755 = vmatmul.f32.gmra.mxu0 %v701
        %v756 = vpop.f32.mrf.mxu0
        %v757 = vadd.f32 %v650, %v756
        %758 = vmatmul.f32.gmra.mxu0 %v704
        %v759 = vpop.f32.mrf.mxu0
        %v760 = vadd.f32 %v655, %v759
        %761 = vmatmul.f32.gmra.mxu0 %v707
        %v762 = vpop.f32.mrf.mxu0
        %v763 = vadd.f32 %v660, %v762
        %764 = vmatmul.f32.gmra.mxu0 %v710
        %v765 = vpop.f32.mrf.mxu0
        %v766 = vadd.f32 %v665, %v765
        %767 = vmatmul.f32.gmra.mxu0 %v713
        %v768 = vpop.f32.mrf.mxu0
        %v769 = vadd.f32 %v670, %v768
        %770 = vmatmul.f32.gmra.mxu0 %v716
        %v771 = vpop.f32.mrf.mxu0
        %v772 = vadd.f32 %v675, %v771
        %773 = vmatmul.f32.gmra.mxu0 %v719
        %v774 = vpop.f32.mrf.mxu0
        %v775 = vadd.f32 %v680, %v774
        %776 = vmatmul.f32.gmra.mxu0 %v722
        %v777 = vpop.f32.mrf.mxu0
        %v778 = vadd.f32 %v685, %v777
        %779 = vdwg.mxu0
        %v780 = vmul.f32 %v745, 0.35355338
        %v781 = vmul.f32 %v748, 0.35355338
        %v782 = vmul.f32 %v751, 0.35355338
        %v783 = vmul.f32 %v754, 0.35355338
        %784 = vxpose.xlu0.b32.start [1/16] %v780, 128
        %785 = vxpose.xlu0.b32.cont [2/16] 0.0, 128
        %786 = vxpose.xlu0.b32.cont [3/16] 0.0, 128
        %787 = vxpose.xlu0.b32.cont [4/16] 0.0, 128
        %788 = vxpose.xlu0.b32.cont [5/16] 0.0, 128
        %789 = vxpose.xlu0.b32.cont [6/16] 0.0, 128
        %790 = vxpose.xlu0.b32.cont [7/16] 0.0, 128
        %791 = vxpose.xlu0.b32.cont [8/16] 0.0, 128
        %792 = vxpose.xlu0.b32.cont [9/16] 0.0, 128
        %793 = vxpose.xlu0.b32.cont [10/16] 0.0, 128
        %794 = vxpose.xlu0.b32.cont [11/16] 0.0, 128
        %795 = vxpose.xlu0.b32.cont [12/16] 0.0, 128
        %796 = vxpose.xlu0.b32.cont [13/16] 0.0, 128
        %797 = vxpose.xlu0.b32.cont [14/16] 0.0, 128
        %798 = vxpose.xlu0.b32.cont [15/16] 0.0, 128
        %799 = vxpose.xlu0.b32.end [16/16] 0.0, 128
        %v800 = vpop.trf.xlu0
        %v801 = vpop.trf.xlu0
        %v802 = vpop.trf.xlu0
        %v803 = vpop.trf.xlu0
        %v804 = vpop.trf.xlu0
        %v805 = vpop.trf.xlu0
        %v806 = vpop.trf.xlu0
        %v807 = vpop.trf.xlu0
        %v808 = vpop.trf.xlu0
        %v809 = vpop.trf.xlu0
        %v810 = vpop.trf.xlu0
        %v811 = vpop.trf.xlu0
        %v812 = vpop.trf.xlu0
        %v813 = vpop.trf.xlu0
        %v814 = vpop.trf.xlu0
        %v815 = vpop.trf.xlu0
        %vm816 = vcmask 64512
        %v818 = vsel %vm816, %v800, 0
        %820 = vmatpush.msra.mxu0 0.0
        %821 = vmatpush.msra.mxu0 0.0
        %822 = vmatpush.msra.mxu0 0.0
        %823 = vmatpush.msra.mxu0 0.0
        %824 = vmatpush.msra.mxu0 0.0
        %825 = vmatpush.msra.mxu0 0.0
        %826 = vmatpush.msra.mxu0 0.0
        %827 = vmatpush.msra.mxu0 0.0
        %828 = vmatpush.msra.mxu0 0.0
        %829 = vmatpush.msra.mxu0 0.0
        %830 = vmatpush.msra.mxu0 0.0
        %831 = vmatpush.msra.mxu0 0.0
        %832 = vmatpush.msra.mxu0 0.0
        %833 = vmatpush.msra.mxu0 0.0
        %834 = vmatpush.msra.mxu0 0.0
        %835 = vmatpush.msra.mxu0 %v757
        %836 = vmatmul.f32.gmra.mxu0 %v818
        %v837 = vpop.f32.mrf.mxu0
        %v838 = vadd.f32 %v602, %v837
        %839 = vdwg.mxu0
        %840 = vxpose.xlu0.b32.start [1/16] %v781, 128
        %841 = vxpose.xlu0.b32.cont [2/16] 0.0, 128
        %842 = vxpose.xlu0.b32.cont [3/16] 0.0, 128
        %843 = vxpose.xlu0.b32.cont [4/16] 0.0, 128
        %844 = vxpose.xlu0.b32.cont [5/16] 0.0, 128
        %845 = vxpose.xlu0.b32.cont [6/16] 0.0, 128
        %846 = vxpose.xlu0.b32.cont [7/16] 0.0, 128
        %847 = vxpose.xlu0.b32.cont [8/16] 0.0, 128
        %848 = vxpose.xlu0.b32.cont [9/16] 0.0, 128
        %849 = vxpose.xlu0.b32.cont [10/16] 0.0, 128
        %850 = vxpose.xlu0.b32.cont [11/16] 0.0, 128
        %851 = vxpose.xlu0.b32.cont [12/16] 0.0, 128
        %852 = vxpose.xlu0.b32.cont [13/16] 0.0, 128
        %853 = vxpose.xlu0.b32.cont [14/16] 0.0, 128
        %854 = vxpose.xlu0.b32.cont [15/16] 0.0, 128
        %855 = vxpose.xlu0.b32.end [16/16] 0.0, 128
        %v856 = vpop.trf.xlu0
        %v857 = vpop.trf.xlu0
        %v858 = vpop.trf.xlu0
        %v859 = vpop.trf.xlu0
        %v860 = vpop.trf.xlu0
        %v861 = vpop.trf.xlu0
        %v862 = vpop.trf.xlu0
        %v863 = vpop.trf.xlu0
        %v864 = vpop.trf.xlu0
        %v865 = vpop.trf.xlu0
        %v866 = vpop.trf.xlu0
        %v867 = vpop.trf.xlu0
        %v868 = vpop.trf.xlu0
        %v869 = vpop.trf.xlu0
        %v870 = vpop.trf.xlu0
        %v871 = vpop.trf.xlu0
        %v873 = vsel %vm816, %v856, 0
        %875 = vmatpush.msra.mxu0 0.0
        %876 = vmatpush.msra.mxu0 0.0
        %877 = vmatpush.msra.mxu0 0.0
        %878 = vmatpush.msra.mxu0 0.0
        %879 = vmatpush.msra.mxu0 0.0
        %880 = vmatpush.msra.mxu0 0.0
        %881 = vmatpush.msra.mxu0 0.0
        %882 = vmatpush.msra.mxu0 0.0
        %883 = vmatpush.msra.mxu0 0.0
        %884 = vmatpush.msra.mxu0 0.0
        %885 = vmatpush.msra.mxu0 0.0
        %886 = vmatpush.msra.mxu0 0.0
        %887 = vmatpush.msra.mxu0 0.0
        %888 = vmatpush.msra.mxu0 0.0
        %889 = vmatpush.msra.mxu0 0.0
        %890 = vmatpush.msra.mxu0 %v760
        %891 = vmatmul.f32.gmra.mxu0 %v873
        %v892 = vpop.f32.mrf.mxu0
        %v893 = vadd.f32 %v602, %v892
        %894 = vdwg.mxu0
        %895 = vxpose.xlu0.b32.start [1/16] %v782, 128
        %896 = vxpose.xlu0.b32.cont [2/16] 0.0, 128
        %897 = vxpose.xlu0.b32.cont [3/16] 0.0, 128
        %898 = vxpose.xlu0.b32.cont [4/16] 0.0, 128
        %899 = vxpose.xlu0.b32.cont [5/16] 0.0, 128
        %900 = vxpose.xlu0.b32.cont [6/16] 0.0, 128
        %901 = vxpose.xlu0.b32.cont [7/16] 0.0, 128
        %902 = vxpose.xlu0.b32.cont [8/16] 0.0, 128
        %903 = vxpose.xlu0.b32.cont [9/16] 0.0, 128
        %904 = vxpose.xlu0.b32.cont [10/16] 0.0, 128
        %905 = vxpose.xlu0.b32.cont [11/16] 0.0, 128
        %906 = vxpose.xlu0.b32.cont [12/16] 0.0, 128
        %907 = vxpose.xlu0.b32.cont [13/16] 0.0, 128
        %908 = vxpose.xlu0.b32.cont [14/16] 0.0, 128
        %909 = vxpose.xlu0.b32.cont [15/16] 0.0, 128
        %910 = vxpose.xlu0.b32.end [16/16] 0.0, 128
        %v911 = vpop.trf.xlu0
        %v912 = vpop.trf.xlu0
        %v913 = vpop.trf.xlu0
        %v914 = vpop.trf.xlu0
        %v915 = vpop.trf.xlu0
        %v916 = vpop.trf.xlu0
        %v917 = vpop.trf.xlu0
        %v918 = vpop.trf.xlu0
        %v919 = vpop.trf.xlu0
        %v920 = vpop.trf.xlu0
        %v921 = vpop.trf.xlu0
        %v922 = vpop.trf.xlu0
        %v923 = vpop.trf.xlu0
        %v924 = vpop.trf.xlu0
        %v925 = vpop.trf.xlu0
        %v926 = vpop.trf.xlu0
        %v928 = vsel %vm816, %v911, 0
        %930 = vmatpush.msra.mxu0 0.0
        %931 = vmatpush.msra.mxu0 0.0
        %932 = vmatpush.msra.mxu0 0.0
        %933 = vmatpush.msra.mxu0 0.0
        %934 = vmatpush.msra.mxu0 0.0
        %935 = vmatpush.msra.mxu0 0.0
        %936 = vmatpush.msra.mxu0 0.0
        %937 = vmatpush.msra.mxu0 0.0
        %938 = vmatpush.msra.mxu0 0.0
        %939 = vmatpush.msra.mxu0 0.0
        %940 = vmatpush.msra.mxu0 0.0
        %941 = vmatpush.msra.mxu0 0.0
        %942 = vmatpush.msra.mxu0 0.0
        %943 = vmatpush.msra.mxu0 0.0
        %944 = vmatpush.msra.mxu0 0.0
        %945 = vmatpush.msra.mxu0 %v763
        %946 = vmatmul.f32.gmra.mxu0 %v928
        %v947 = vpop.f32.mrf.mxu0
        %v948 = vadd.f32 %v602, %v947
        %949 = vdwg.mxu0
        %950 = vxpose.xlu0.b32.start [1/16] %v783, 128
        %951 = vxpose.xlu0.b32.cont [2/16] 0.0, 128
        %952 = vxpose.xlu0.b32.cont [3/16] 0.0, 128
        %953 = vxpose.xlu0.b32.cont [4/16] 0.0, 128
        %954 = vxpose.xlu0.b32.cont [5/16] 0.0, 128
        %955 = vxpose.xlu0.b32.cont [6/16] 0.0, 128
        %956 = vxpose.xlu0.b32.cont [7/16] 0.0, 128
        %957 = vxpose.xlu0.b32.cont [8/16] 0.0, 128
        %958 = vxpose.xlu0.b32.cont [9/16] 0.0, 128
        %959 = vxpose.xlu0.b32.cont [10/16] 0.0, 128
        %960 = vxpose.xlu0.b32.cont [11/16] 0.0, 128
        %961 = vxpose.xlu0.b32.cont [12/16] 0.0, 128
        %962 = vxpose.xlu0.b32.cont [13/16] 0.0, 128
        %963 = vxpose.xlu0.b32.cont [14/16] 0.0, 128
        %964 = vxpose.xlu0.b32.cont [15/16] 0.0, 128
        %965 = vxpose.xlu0.b32.end [16/16] 0.0, 128
        %v966 = vpop.trf.xlu0
        %v967 = vpop.trf.xlu0
        %v968 = vpop.trf.xlu0
        %v969 = vpop.trf.xlu0
        %v970 = vpop.trf.xlu0
        %v971 = vpop.trf.xlu0
        %v972 = vpop.trf.xlu0
        %v973 = vpop.trf.xlu0
        %v974 = vpop.trf.xlu0
        %v975 = vpop.trf.xlu0
        %v976 = vpop.trf.xlu0
        %v977 = vpop.trf.xlu0
        %v978 = vpop.trf.xlu0
        %v979 = vpop.trf.xlu0
        %v980 = vpop.trf.xlu0
        %v981 = vpop.trf.xlu0
        %v983 = vsel %vm816, %v966, 0
        %985 = vmatpush.msra.mxu0 0.0
        %986 = vmatpush.msra.mxu0 0.0
        %987 = vmatpush.msra.mxu0 0.0
        %988 = vmatpush.msra.mxu0 0.0
        %989 = vmatpush.msra.mxu0 0.0
        %990 = vmatpush.msra.mxu0 0.0
        %991 = vmatpush.msra.mxu0 0.0
        %992 = vmatpush.msra.mxu0 0.0
        %993 = vmatpush.msra.mxu0 0.0
        %994 = vmatpush.msra.mxu0 0.0
        %995 = vmatpush.msra.mxu0 0.0
        %996 = vmatpush.msra.mxu0 0.0
        %997 = vmatpush.msra.mxu0 0.0
        %998 = vmatpush.msra.mxu0 0.0
        %999 = vmatpush.msra.mxu0 0.0
        %1000 = vmatpush.msra.mxu0 %v766
        %1001 = vmatmul.f32.gmra.mxu0 %v983
        %v1002 = vpop.f32.mrf.mxu0
        %v1003 = vadd.f32 %v602, %v1002
        %1004 = vdwg.mxu0
        %v1005 = vsel %vm816, %v838, -inf
        %1006 = vmax.xlane.f32.xlu0 %v1005
        %v1007 = vpop.xlane.xlu0 %1006
        %v1008 = vsel %vm816, %v893, -inf
        %1009 = vmax.xlane.f32.xlu0 %v1008
        %v1010 = vpop.xlane.xlu0 %1009
        %v1011 = vsel %vm816, %v948, -inf
        %1012 = vmax.xlane.f32.xlu0 %v1011
        %v1013 = vpop.xlane.xlu0 %1012
        %v1014 = vsel %vm816, %v1003, -inf
        %1015 = vmax.xlane.f32.xlu0 %v1014
        %v1016 = vpop.xlane.xlu0 %1015
        %v1017 = vsub.f32 %v838, %v1007
        %v1018 = vsub.f32 %v893, %v1010
        %v1019 = vsub.f32 %v948, %v1013
        %v1020 = vsub.f32 %v1003, %v1016
        %v1021 = vmul.f32 %v1017, 1.442695
        %v1022 = vpow.pop %v1021
        %v1023 = vmul.f32 %v1018, 1.442695
        %v1024 = vpow.pop %v1023
        %v1025 = vmul.f32 %v1019, 1.442695
        %v1026 = vpow.pop %v1025
        %v1027 = vmul.f32 %v1020, 1.442695
        %v1028 = vpow.pop %v1027
        %v1030 = vsel %vm816, 1.0, 0
        %v1033 = vsel %vm816, %v1022, 0
        %1035 = vmatpush.xpose.msra.mxu0 0.0
        %1036 = vmatpush.xpose.msra.mxu0 0.0
        %1037 = vmatpush.xpose.msra.mxu0 0.0
        %1038 = vmatpush.xpose.msra.mxu0 0.0
        %1039 = vmatpush.xpose.msra.mxu0 0.0
        %1040 = vmatpush.xpose.msra.mxu0 0.0
        %1041 = vmatpush.xpose.msra.mxu0 0.0
        %1042 = vmatpush.xpose.msra.mxu0 0.0
        %1043 = vmatpush.xpose.msra.mxu0 0.0
        %1044 = vmatpush.xpose.msra.mxu0 0.0
        %1045 = vmatpush.xpose.msra.mxu0 0.0
        %1046 = vmatpush.xpose.msra.mxu0 0.0
        %1047 = vmatpush.xpose.msra.mxu0 0.0
        %1048 = vmatpush.xpose.msra.mxu0 0.0
        %1049 = vmatpush.xpose.msra.mxu0 0.0
        %1050 = vmatpush.xpose.msra.mxu0 %v1033
        %1051 = vmatmul.f32.gmra.mxu0 %v1030
        %v1052 = vpop.f32.mrf.mxu0
        %v1053 = vadd.f32 0.0, %v1052
        %1054 = vdwg.mxu0
        %v1056 = vsel %vm816, %v1024, 0
        %1058 = vmatpush.xpose.msra.mxu0 0.0
        %1059 = vmatpush.xpose.msra.mxu0 0.0
        %1060 = vmatpush.xpose.msra.mxu0 0.0
        %1061 = vmatpush.xpose.msra.mxu0 0.0
        %1062 = vmatpush.xpose.msra.mxu0 0.0
        %1063 = vmatpush.xpose.msra.mxu0 0.0
        %1064 = vmatpush.xpose.msra.mxu0 0.0
        %1065 = vmatpush.xpose.msra.mxu0 0.0
        %1066 = vmatpush.xpose.msra.mxu0 0.0
        %1067 = vmatpush.xpose.msra.mxu0 0.0
        %1068 = vmatpush.xpose.msra.mxu0 0.0
        %1069 = vmatpush.xpose.msra.mxu0 0.0
        %1070 = vmatpush.xpose.msra.mxu0 0.0
        %1071 = vmatpush.xpose.msra.mxu0 0.0
        %1072 = vmatpush.xpose.msra.mxu0 0.0
        %1073 = vmatpush.xpose.msra.mxu0 %v1056
        %1074 = vmatmul.f32.gmra.mxu0 %v1030
        %v1075 = vpop.f32.mrf.mxu0
        %v1076 = vadd.f32 0.0, %v1075
        %1077 = vdwg.mxu0
        %v1079 = vsel %vm816, %v1026, 0
        %1081 = vmatpush.xpose.msra.mxu0 0.0
        %1082 = vmatpush.xpose.msra.mxu0 0.0
        %1083 = vmatpush.xpose.msra.mxu0 0.0
        %1084 = vmatpush.xpose.msra.mxu0 0.0
        %1085 = vmatpush.xpose.msra.mxu0 0.0
        %1086 = vmatpush.xpose.msra.mxu0 0.0
        %1087 = vmatpush.xpose.msra.mxu0 0.0
        %1088 = vmatpush.xpose.msra.mxu0 0.0
        %1089 = vmatpush.xpose.msra.mxu0 0.0
        %1090 = vmatpush.xpose.msra.mxu0 0.0
        %1091 = vmatpush.xpose.msra.mxu0 0.0
        %1092 = vmatpush.xpose.msra.mxu0 0.0
        %1093 = vmatpush.xpose.msra.mxu0 0.0
        %1094 = vmatpush.xpose.msra.mxu0 0.0
        %1095 = vmatpush.xpose.msra.mxu0 0.0
        %1096 = vmatpush.xpose.msra.mxu0 %v1079
        %1097 = vmatmul.f32.gmra.mxu0 %v1030
        %v1098 = vpop.f32.mrf.mxu0
        %v1099 = vadd.f32 0.0, %v1098
        %1100 = vdwg.mxu0
        %v1102 = vsel %vm816, %v1028, 0
        %1104 = vmatpush.xpose.msra.mxu0 0.0
        %1105 = vmatpush.xpose.msra.mxu0 0.0
        %1106 = vmatpush.xpose.msra.mxu0 0.0
        %1107 = vmatpush.xpose.msra.mxu0 0.0
        %1108 = vmatpush.xpose.msra.mxu0 0.0
        %1109 = vmatpush.xpose.msra.mxu0 0.0
        %1110 = vmatpush.xpose.msra.mxu0 0.0
        %1111 = vmatpush.xpose.msra.mxu0 0.0
        %1112 = vmatpush.xpose.msra.mxu0 0.0
        %1113 = vmatpush.xpose.msra.mxu0 0.0
        %1114 = vmatpush.xpose.msra.mxu0 0.0
        %1115 = vmatpush.xpose.msra.mxu0 0.0
        %1116 = vmatpush.xpose.msra.mxu0 0.0
        %1117 = vmatpush.xpose.msra.mxu0 0.0
        %1118 = vmatpush.xpose.msra.mxu0 0.0
        %1119 = vmatpush.xpose.msra.mxu0 %v1102
        %1120 = vmatmul.f32.gmra.mxu0 %v1030
        %v1121 = vpop.f32.mrf.mxu0
        %v1122 = vadd.f32 0.0, %v1121
        %1123 = vdwg.mxu0
        %v1125 = vsel %vm816, %v769, 0
        %1127 = vmatpush.xpose.msra.mxu0 0.0
        %1128 = vmatpush.xpose.msra.mxu0 0.0
        %1129 = vmatpush.xpose.msra.mxu0 0.0
        %1130 = vmatpush.xpose.msra.mxu0 0.0
        %1131 = vmatpush.xpose.msra.mxu0 0.0
        %1132 = vmatpush.xpose.msra.mxu0 0.0
        %1133 = vmatpush.xpose.msra.mxu0 0.0
        %1134 = vmatpush.xpose.msra.mxu0 0.0
        %1135 = vmatpush.xpose.msra.mxu0 0.0
        %1136 = vmatpush.xpose.msra.mxu0 0.0
        %1137 = vmatpush.xpose.msra.mxu0 0.0
        %1138 = vmatpush.xpose.msra.mxu0 0.0
        %1139 = vmatpush.xpose.msra.mxu0 0.0
        %1140 = vmatpush.xpose.msra.mxu0 0.0
        %1141 = vmatpush.xpose.msra.mxu0 0.0
        %1142 = vmatpush.xpose.msra.mxu0 %v1033
        %1143 = vmatmul.f32.gmra.mxu0 %v1125
        %v1144 = vpop.f32.mrf.mxu0
        %v1145 = vadd.f32 0.0, %v1144
        %1146 = vdwg.mxu0
        %v1148 = vsel %vm816, %v772, 0
        %1150 = vmatpush.xpose.msra.mxu0 0.0
        %1151 = vmatpush.xpose.msra.mxu0 0.0
        %1152 = vmatpush.xpose.msra.mxu0 0.0
        %1153 = vmatpush.xpose.msra.mxu0 0.0
        %1154 = vmatpush.xpose.msra.mxu0 0.0
        %1155 = vmatpush.xpose.msra.mxu0 0.0
        %1156 = vmatpush.xpose.msra.mxu0 0.0
        %1157 = vmatpush.xpose.msra.mxu0 0.0
        %1158 = vmatpush.xpose.msra.mxu0 0.0
        %1159 = vmatpush.xpose.msra.mxu0 0.0
        %1160 = vmatpush.xpose.msra.mxu0 0.0
        %1161 = vmatpush.xpose.msra.mxu0 0.0
        %1162 = vmatpush.xpose.msra.mxu0 0.0
        %1163 = vmatpush.xpose.msra.mxu0 0.0
        %1164 = vmatpush.xpose.msra.mxu0 0.0
        %1165 = vmatpush.xpose.msra.mxu0 %v1056
        %1166 = vmatmul.f32.gmra.mxu0 %v1148
        %v1167 = vpop.f32.mrf.mxu0
        %v1168 = vadd.f32 0.0, %v1167
        %1169 = vdwg.mxu0
        %v1171 = vsel %vm816, %v775, 0
        %1173 = vmatpush.xpose.msra.mxu0 0.0
        %1174 = vmatpush.xpose.msra.mxu0 0.0
        %1175 = vmatpush.xpose.msra.mxu0 0.0
        %1176 = vmatpush.xpose.msra.mxu0 0.0
        %1177 = vmatpush.xpose.msra.mxu0 0.0
        %1178 = vmatpush.xpose.msra.mxu0 0.0
        %1179 = vmatpush.xpose.msra.mxu0 0.0
        %1180 = vmatpush.xpose.msra.mxu0 0.0
        %1181 = vmatpush.xpose.msra.mxu0 0.0
        %1182 = vmatpush.xpose.msra.mxu0 0.0
        %1183 = vmatpush.xpose.msra.mxu0 0.0
        %1184 = vmatpush.xpose.msra.mxu0 0.0
        %1185 = vmatpush.xpose.msra.mxu0 0.0
        %1186 = vmatpush.xpose.msra.mxu0 0.0
        %1187 = vmatpush.xpose.msra.mxu0 0.0
        %1188 = vmatpush.xpose.msra.mxu0 %v1079
        %1189 = vmatmul.f32.gmra.mxu0 %v1171
        %v1190 = vpop.f32.mrf.mxu0
        %v1191 = vadd.f32 0.0, %v1190
        %1192 = vdwg.mxu0
        %v1194 = vsel %vm816, %v778, 0
        %1196 = vmatpush.xpose.msra.mxu0 0.0
        %1197 = vmatpush.xpose.msra.mxu0 0.0
        %1198 = vmatpush.xpose.msra.mxu0 0.0
        %1199 = vmatpush.xpose.msra.mxu0 0.0
        %1200 = vmatpush.xpose.msra.mxu0 0.0
        %1201 = vmatpush.xpose.msra.mxu0 0.0
        %1202 = vmatpush.xpose.msra.mxu0 0.0
        %1203 = vmatpush.xpose.msra.mxu0 0.0
        %1204 = vmatpush.xpose.msra.mxu0 0.0
        %1205 = vmatpush.xpose.msra.mxu0 0.0
        %1206 = vmatpush.xpose.msra.mxu0 0.0
        %1207 = vmatpush.xpose.msra.mxu0 0.0
        %1208 = vmatpush.xpose.msra.mxu0 0.0
        %1209 = vmatpush.xpose.msra.mxu0 0.0
        %1210 = vmatpush.xpose.msra.mxu0 0.0
        %1211 = vmatpush.xpose.msra.mxu0 %v1102
        %1212 = vmatmul.f32.gmra.mxu0 %v1194
        %v1213 = vpop.f32.mrf.mxu0
        %v1214 = vadd.f32 0.0, %v1213
        %1215 = vdwg.mxu0
        %v1216 = vrcp.pop %v1053
        %v1217 = vrcp.pop %v1076
        %v1218 = vrcp.pop %v1099
        %v1219 = vrcp.pop %v1122
        %v1220 = vperm.slane %v1216, 0
        %v1221 = vperm.slane %v1217, 0
        %v1222 = vperm.slane %v1218, 0
        %v1223 = vperm.slane %v1219, 0
        %v1224 = vmul.f32 %v1145, %v1220
        %v1225 = vmul.f32 %v1168, %v1221
        %v1226 = vmul.f32 %v1191, %v1222
        %v1227 = vmul.f32 %v1214, %v1223
        %v1228 = vld [vmem:[%s6] sm:$0xff]
        %v1229 = vld [vmem:[%s6 + $0x8] sm:$0xff]
        %v1230 = vld [vmem:[%s6 + $0x10] sm:$0xff]
        %v1231 = vld [vmem:[%s6 + $0x18] sm:$0xff]
        %v1232 = vld [vmem:[%s7] sm:$0x1]
        %v1234 = vperm.slane %v1232, 0
        %1236 = vxpose.xlu0.b32.start [1/16] %v1224, 128
        %1237 = vxpose.xlu0.b32.cont [2/16] %v1225, 128
        %1238 = vxpose.xlu0.b32.cont [3/16] %v1226, 128
        %1239 = vxpose.xlu0.b32.cont [4/16] %v1227, 128
        %1240 = vxpose.xlu0.b32.cont [5/16] 0.0, 128
        %1241 = vxpose.xlu0.b32.cont [6/16] 0.0, 128
        %1242 = vxpose.xlu0.b32.cont [7/16] 0.0, 128
        %1243 = vxpose.xlu0.b32.cont [8/16] 0.0, 128
        %1244 = vxpose.xlu0.b32.cont [9/16] 0.0, 128
        %1245 = vxpose.xlu0.b32.cont [10/16] 0.0, 128
        %1246 = vxpose.xlu0.b32.cont [11/16] 0.0, 128
        %1247 = vxpose.xlu0.b32.cont [12/16] 0.0, 128
        %1248 = vxpose.xlu0.b32.cont [13/16] 0.0, 128
        %1249 = vxpose.xlu0.b32.cont [14/16] 0.0, 128
        %1250 = vxpose.xlu0.b32.cont [15/16] 0.0, 128
        %1251 = vxpose.xlu0.b32.end [16/16] 0.0, 128
        %v1252 = vpop.trf.xlu0
        %v1253 = vpop.trf.xlu0
        %v1254 = vpop.trf.xlu0
        %v1255 = vpop.trf.xlu0
        %v1256 = vpop.trf.xlu0
        %v1257 = vpop.trf.xlu0
        %v1258 = vpop.trf.xlu0
        %v1259 = vpop.trf.xlu0
        %v1260 = vpop.trf.xlu0
        %v1261 = vpop.trf.xlu0
        %v1262 = vpop.trf.xlu0
        %v1263 = vpop.trf.xlu0
        %v1264 = vpop.trf.xlu0
        %v1265 = vpop.trf.xlu0
        %v1266 = vpop.trf.xlu0
        %v1267 = vpop.trf.xlu0
        %v1269 = vsel %vm687, %v1252, 0
        %1271 = vmatpush.msra.mxu0 0.0
        %1272 = vmatpush.msra.mxu0 0.0
        %1273 = vmatpush.msra.mxu0 0.0
        %1274 = vmatpush.msra.mxu0 0.0
        %1275 = vmatpush.msra.mxu0 0.0
        %1276 = vmatpush.msra.mxu0 0.0
        %1277 = vmatpush.msra.mxu0 0.0
        %1278 = vmatpush.msra.mxu0 0.0
        %1279 = vmatpush.msra.mxu0 0.0
        %1280 = vmatpush.msra.mxu0 0.0
        %1281 = vmatpush.msra.mxu0 0.0
        %1282 = vmatpush.msra.mxu0 0.0
        %1283 = vmatpush.msra.mxu0 %v1231
        %1284 = vmatpush.msra.mxu0 %v1230
        %1285 = vmatpush.msra.mxu0 %v1229
        %1286 = vmatpush.msra.mxu0 %v1228
        %1287 = vmatmul.f32.gmra.mxu0 %v1269
        %v1288 = vpop.f32.mrf.mxu0
        %v1289 = vadd.f32 %v1234, %v1288
        %1290 = vdwg.mxu0
        %v1291 = vadd.f32 %v600, %v1289
        %v1292 = vld [vmem:[%s8] sm:$0x1]
        %v1293 = vld [vmem:[%s9] sm:$0x1]
        %v1294 = vsel %vm687, %v1291, 0.0
        %1295 = vadd.xlane.f32.xlu0 %v1294
        %v1296 = vpop.xlane.xlu0 %1295
        %v1297 = vrcp.pop 32.0
        %v1298 = vmul.f32 32.0, %v1297
        %v1299 = vsub.f32 1.0, %v1298
        %v1300 = vmul.f32 %v1297, %v1299
        %v1301 = vadd.f32 %v1297, %v1300
        %vm1302 = vweird.f32 %v1297
        %v1303 = vsel %vm1302, %v1297, %v1301
        %v1304 = vmul.f32 %v1296, %v1303
        %v1305 = vsub.f32 %v1291, %v1304
        %v1306 = vmul.f32 %v1305, %v1305
        %v1307 = vsel %vm687, %v1306, 0.0
        %1308 = vadd.xlane.f32.xlu0 %v1307
        %v1309 = vpop.xlane.xlu0 %1308
        %v1310 = vmul.f32 %v1309, %v1303
        %v1311 = vadd.f32 %v1310, 1e-05
        %v1312 = vrsqrt.pop %v1311
        %v1313 = vmul.f32 %v1312, %v1311
        %v1314 = vmul.f32 %v1313, %v1312
        %v1315 = vmul.f32 0.5, %v1314
        %v1316 = vsub.f32 1.5, %v1315
        %v1317 = vmul.f32 %v1312, %v1316
        %vm1318 = vweird.f32 %v1311
        %vm1319 = vweird.f32 %v1312
        %vm1320 = vmor %vm1318, %vm1319
        %v1321 = vsel %vm1320, %v1312, %v1317
        %v1322 = vmul.f32 %v1305, %v1321
        %v1324 = vperm.slane %v1292, 0
        %v1326 = vmul.f32 %v1322, %v1324
        %v1328 = vperm.slane %v1293, 0
        %v1330 = vadd.f32 %v1326, %v1328
        %v1331 = vld [vmem:[%s10] sm:$0xff]
        %v1332 = vld [vmem:[%s10 + $0x8] sm:$0xff]
        %v1333 = vld [vmem:[%s10 + $0x10] sm:$0xff]
        %v1334 = vld [vmem:[%s10 + $0x18] sm:$0xff]
        %v1335 = vld [vmem:[%s11] sm:$0x1]
        %v1337 = vperm.slane %v1335, 0
        %v1340 = vsel %vm687, %v1330, 0
        %1342 = vmatpush.msra.mxu0 0.0
        %1343 = vmatpush.msra.mxu0 0.0
        %1344 = vmatpush.msra.mxu0 0.0
        %1345 = vmatpush.msra.mxu0 0.0
        %1346 = vmatpush.msra.mxu0 0.0
        %1347 = vmatpush.msra.mxu0 0.0
        %1348 = vmatpush.msra.mxu0 0.0
        %1349 = vmatpush.msra.mxu0 0.0
        %1350 = vmatpush.msra.mxu0 0.0
        %1351 = vmatpush.msra.mxu0 0.0
        %1352 = vmatpush.msra.mxu0 0.0
        %1353 = vmatpush.msra.mxu0 0.0
        %1354 = vmatpush.msra.mxu0 %v1334
        %1355 = vmatpush.msra.mxu0 %v1333
        %1356 = vmatpush.msra.mxu0 %v1332
        %1357 = vmatpush.msra.mxu0 %v1331
        %1358 = vmatmul.f32.gmra.mxu0 %v1340
        %v1359 = vpop.f32.mrf.mxu0
        %v1360 = vadd.f32 %v1337, %v1359
        %1361 = vdwg.mxu0
        %v1362 = vmul.f32 %v1360, 0.5
        %v1363 = vmul.f32 %v1360, %v1360
        %v1364 = vmul.f32 %v1360, %v1363
        %v1365 = vmul.f32 %v1364, 0.044715
        %v1366 = vadd.f32 %v1360, %v1365
        %v1367 = vmul.f32 %v1366, 0.7978846
        %v1368 = vtanh.pop %v1367
        %v1369 = vadd.f32 %v1368, 1.0
        %v1370 = vmul.f32 %v1362, %v1369
        %v1371 = vld [vmem:[%s12] sm:$0xff]
        %v1372 = vld [vmem:[%s12 + $0x8] sm:$0xff]
        %v1373 = vld [vmem:[%s12 + $0x10] sm:$0xff]
        %v1374 = vld [vmem:[%s12 + $0x18] sm:$0xff]
        %v1375 = vld [vmem:[%s12 + $0x20] sm:$0xff]
        %v1376 = vld [vmem:[%s12 + $0x28] sm:$0xff]
        %v1377 = vld [vmem:[%s12 + $0x30] sm:$0xff]
        %v1378 = vld [vmem:[%s12 + $0x38] sm:$0xff]
        %v1379 = vld [vmem:[%s12 + $0x40] sm:$0xff]
        %v1380 = vld [vmem:[%s12 + $0x48] sm:$0xff]
        %v1381 = vld [vmem:[%s12 + $0x50] sm:$0xff]
        %v1382 = vld [vmem:[%s12 + $0x58] sm:$0xff]
        %v1383 = vld [vmem:[%s12 + $0x60] sm:$0xff]
        %v1384 = vld [vmem:[%s12 + $0x68] sm:$0xff]
        %v1385 = vld [vmem:[%s12 + $0x70] sm:$0xff]
        %v1386 = vld [vmem:[%s12 + $0x78] sm:$0xff]
        %v1387 = vld [vmem:[%s13] sm:$0x1]
        %v1389 = vperm.slane %v1387, 0
        %1391 = vmatpush.msra.mxu0 %v1386
        %1392 = vmatpush.msra.mxu0 %v1385
        %1393 = vmatpush.msra.mxu0 %v1384
        %1394 = vmatpush.msra.mxu0 %v1383
        %1395 = vmatpush.msra.mxu0 %v1382
        %1396 = vmatpush.msra.mxu0 %v1381
        %1397 = vmatpush.msra.mxu0 %v1380
        %1398 = vmatpush.msra.mxu0 %v1379
        %1399 = vmatpush.msra.mxu0 %v1378
        %1400 = vmatpush.msra.mxu0 %v1377
        %1401 = vmatpush.msra.mxu0 %v1376
        %1402 = vmatpush.msra.mxu0 %v1375
        %1403 = vmatpush.msra.mxu0 %v1374
        %1404 = vmatpush.msra.mxu0 %v1373
        %1405 = vmatpush.msra.mxu0 %v1372
        %1406 = vmatpush.msra.mxu0 %v1371
        %1407 = vmatmul.f32.gmra.mxu0 %v1370
        %v1408 = vpop.f32.mrf.mxu0
        %v1409 = vadd.f32 %v1389, %v1408
        %1410 = vdwg.mxu0
        %v1411 = vadd.f32 %v1409, %v1330
        %v1412 = vld [vmem:[%s14] sm:$0x1]
        %v1413 = vld [vmem:[%s15] sm:$0x1]
        %v1414 = vsel %vm687, %v1411, 0.0
        %1415 = vadd.xlane.f32.xlu0 %v1414
        %v1416 = vpop.xlane.xlu0 %1415
        %v1417 = vmul.f32 %v1416, %v1303
        %v1418 = vsub.f32 %v1411, %v1417
        %v1419 = vmul.f32 %v1418, %v1418
        %v1420 = vsel %vm687, %v1419, 0.0
        %1421 = vadd.xlane.f32.xlu0 %v1420
        %v1422 = vpop.xlane.xlu0 %1421
        %v1423 = vmul.f32 %v1422, %v1303
        %v1424 = vadd.f32 %v1423, 1e-05
        %v1425 = vrsqrt.pop %v1424
        %v1426 = vmul.f32 %v1425, %v1424
        %v1427 = vmul.f32 %v1426, %v1425
        %v1428 = vmul.f32 0.5, %v1427
        %v1429 = vsub.f32 1.5, %v1428
        %v1430 = vmul.f32 %v1425, %v1429
        %vm1431 = vweird.f32 %v1424
        %vm1432 = vweird.f32 %v1425
        %vm1433 = vmor %vm1431, %vm1432
        %v1434 = vsel %vm1433, %v1425, %v1430
        %v1435 = vmul.f32 %v1418, %v1434
        %v1437 = vperm.slane %v1412, 0
        %v1439 = vmul.f32 %v1435, %v1437
        %v1441 = vperm.slane %v1413, 0
        %v1443 = vadd.f32 %v1439, %v1441
        %s1444 = scalar_lea.vmem %s4, 96
        %v1445 = vld [vmem:[%s1444] sm:$0xff]
        %v1446 = vld [vmem:[%s1444 + $0x8] sm:$0xff]
        %v1447 = vld [vmem:[%s1444 + $0x10] sm:$0xff]
        %v1448 = vld [vmem:[%s1444 + $0x18] sm:$0xff]
        %v1449 = vld [vmem:[%s1444 + $0x20] sm:$0xff]
        %v1450 = vld [vmem:[%s1444 + $0x28] sm:$0xff]
        %v1451 = vld [vmem:[%s1444 + $0x30] sm:$0xff]
        %v1452 = vld [vmem:[%s1444 + $0x38] sm:$0xff]
        %v1453 = vld [vmem:[%s1444 + $0x40] sm:$0xff]
        %v1454 = vld [vmem:[%s1444 + $0x48] sm:$0xff]
        %v1455 = vld [vmem:[%s1444 + $0x50] sm:$0xff]
        %v1456 = vld [vmem:[%s1444 + $0x58] sm:$0xff]
        %s1457 = scalar_lea.vmem %s5, 96
        %v1458 = vld [vmem:[%s1457] sm:$0xff]
        %v1459 = vld [vmem:[%s1457 + $0x8] sm:$0xff]
        %v1460 = vld [vmem:[%s1457 + $0x10] sm:$0xff]
        %v1461 = vld [vmem:[%s1457 + $0x18] sm:$0xff]
        %v1462 = vld [vmem:[%s1457 + $0x20] sm:$0xff]
        %v1463 = vld [vmem:[%s1457 + $0x28] sm:$0xff]
        %v1464 = vld [vmem:[%s1457 + $0x30] sm:$0xff]
        %v1465 = vld [vmem:[%s1457 + $0x38] sm:$0xff]
        %v1466 = vld [vmem:[%s1457 + $0x40] sm:$0xff]
        %v1467 = vld [vmem:[%s1457 + $0x48] sm:$0xff]
        %v1468 = vld [vmem:[%s1457 + $0x50] sm:$0xff]
        %v1469 = vld [vmem:[%s1457 + $0x58] sm:$0xff]
        %1471 = vset.pattern.permute.xlu0 0
        %1472 = vperm.xlu0 %1471, %v1458
        %v1473 = vpop.permute.xlu0 %1472
        %1476 = vset.pattern.permute.xlu0 0
        %1477 = vperm.xlu0 %1476, %v1459
        %v1478 = vpop.permute.xlu0 %1477
        %1481 = vset.pattern.permute.xlu0 0
        %1482 = vperm.xlu0 %1481, %v1460
        %v1483 = vpop.permute.xlu0 %1482
        %1486 = vset.pattern.permute.xlu0 0
        %1487 = vperm.xlu0 %1486, %v1461
        %v1488 = vpop.permute.xlu0 %1487
        %1491 = vset.pattern.permute.xlu0 0
        %1492 = vperm.xlu0 %1491, %v1462
        %v1493 = vpop.permute.xlu0 %1492
        %1496 = vset.pattern.permute.xlu0 0
        %1497 = vperm.xlu0 %1496, %v1463
        %v1498 = vpop.permute.xlu0 %1497
        %1501 = vset.pattern.permute.xlu0 0
        %1502 = vperm.xlu0 %1501, %v1464
        %v1503 = vpop.permute.xlu0 %1502
        %1506 = vset.pattern.permute.xlu0 0
        %1507 = vperm.xlu0 %1506, %v1465
        %v1508 = vpop.permute.xlu0 %1507
        %1511 = vset.pattern.permute.xlu0 0
        %1512 = vperm.xlu0 %1511, %v1466
        %v1513 = vpop.permute.xlu0 %1512
        %1516 = vset.pattern.permute.xlu0 0
        %1517 = vperm.xlu0 %1516, %v1467
        %v1518 = vpop.permute.xlu0 %1517
        %1521 = vset.pattern.permute.xlu0 0
        %1522 = vperm.xlu0 %1521, %v1468
        %v1523 = vpop.permute.xlu0 %1522
        %1526 = vset.pattern.permute.xlu0 0
        %1527 = vperm.xlu0 %1526, %v1469
        %v1528 = vpop.permute.xlu0 %1527
        %v1531 = vsel %vm687, %v1445, 0
        %v1534 = vsel %vm687, %v1446, 0
        %v1537 = vsel %vm687, %v1447, 0
        %v1540 = vsel %vm687, %v1448, 0
        %v1543 = vsel %vm687, %v1449, 0
        %v1546 = vsel %vm687, %v1450, 0
        %v1549 = vsel %vm687, %v1451, 0
        %v1552 = vsel %vm687, %v1452, 0
        %v1555 = vsel %vm687, %v1453, 0
        %v1558 = vsel %vm687, %v1454, 0
        %v1561 = vsel %vm687, %v1455, 0
        %v1564 = vsel %vm687, %v1456, 0
        %v1567 = vsel %vm687, %v1443, 0
        %1569 = vmatpush.xpose.msra.mxu0 0.0
        %1570 = vmatpush.xpose.msra.mxu0 0.0
        %1571 = vmatpush.xpose.msra.mxu0 0.0
        %1572 = vmatpush.xpose.msra.mxu0 0.0
        %1573 = vmatpush.xpose.msra.mxu0 0.0
        %1574 = vmatpush.xpose.msra.mxu0 0.0
        %1575 = vmatpush.xpose.msra.mxu0 0.0
        %1576 = vmatpush.xpose.msra.mxu0 0.0
        %1577 = vmatpush.xpose.msra.mxu0 0.0
        %1578 = vmatpush.xpose.msra.mxu0 0.0
        %1579 = vmatpush.xpose.msra.mxu0 0.0
        %1580 = vmatpush.xpose.msra.mxu0 0.0
        %1581 = vmatpush.xpose.msra.mxu0 0.0
        %1582 = vmatpush.xpose.msra.mxu0 0.0
        %1583 = vmatpush.xpose.msra.mxu0 0.0
        %1584 = vmatpush.xpose.msra.mxu0 %v1567
        %1585 = vmatmul.f32.gmra.mxu0 %v1531
        %v1586 = vpop.f32.mrf.mxu0
        %v1587 = vadd.f32 %v1473, %v1586
        %1588 = vmatmul.f32.gmra.mxu0 %v1534
        %v1589 = vpop.f32.mrf.mxu0
        %v1590 = vadd.f32 %v1478, %v1589
        %1591 = vmatmul.f32.gmra.mxu0 %v1537
        %v1592 = vpop.f32.mrf.mxu0
        %v1593 = vadd.f32 %v1483, %v1592
        %1594 = vmatmul.f32.gmra.mxu0 %v1540
        %v1595 = vpop.f32.mrf.mxu0
        %v1596 = vadd.f32 %v1488, %v1595
        %1597 = vmatmul.f32.gmra.mxu0 %v1543
        %v1598 = vpop.f32.mrf.mxu0
        %v1599 = vadd.f32 %v1493, %v1598
        %1600 = vmatmul.f32.gmra.mxu0 %v1546
        %v1601 = vpop.f32.mrf.mxu0
        %v1602 = vadd.f32 %v1498, %v1601
        %1603 = vmatmul.f32.gmra.mxu0 %v1549
        %v1604 = vpop.f32.mrf.mxu0
        %v1605 = vadd.f32 %v1503, %v1604
        %1606 = vmatmul.f32.gmra.mxu0 %v1552
        %v1607 = vpop.f32.mrf.mxu0
        %v1608 = vadd.f32 %v1508, %v1607
        %1609 = vmatmul.f32.gmra.mxu0 %v1555
        %v1610 = vpop.f32.mrf.mxu0
        %v1611 = vadd.f32 %v1513, %v1610
        %1612 = vmatmul.f32.gmra.mxu0 %v1558
        %v1613 = vpop.f32.mrf.mxu0
        %v1614 = vadd.f32 %v1518, %v1613
        %1615 = vmatmul.f32.gmra.mxu0 %v1561
        %v1616 = vpop.f32.mrf.mxu0
        %v1617 = vadd.f32 %v1523, %v1616
        %1618 = vmatmul.f32.gmra.mxu0 %v1564
        %v1619 = vpop.f32.mrf.mxu0
        %v1620 = vadd.f32 %v1528, %v1619
        %1621 = vdwg.mxu0
        %v1622 = vmul.f32 %v1587, 0.35355338
        %v1623 = vmul.f32 %v1590, 0.35355338
        %v1624 = vmul.f32 %v1593, 0.35355338
        %v1625 = vmul.f32 %v1596, 0.35355338
        %1626 = vxpose.xlu0.b32.start [1/16] %v1622, 128
        %1627 = vxpose.xlu0.b32.cont [2/16] 0.0, 128
        %1628 = vxpose.xlu0.b32.cont [3/16] 0.0, 128
        %1629 = vxpose.xlu0.b32.cont [4/16] 0.0, 128
        %1630 = vxpose.xlu0.b32.cont [5/16] 0.0, 128
        %1631 = vxpose.xlu0.b32.cont [6/16] 0.0, 128
        %1632 = vxpose.xlu0.b32.cont [7/16] 0.0, 128
        %1633 = vxpose.xlu0.b32.cont [8/16] 0.0, 128
        %1634 = vxpose.xlu0.b32.cont [9/16] 0.0, 128
        %1635 = vxpose.xlu0.b32.cont [10/16] 0.0, 128
        %1636 = vxpose.xlu0.b32.cont [11/16] 0.0, 128
        %1637 = vxpose.xlu0.b32.cont [12/16] 0.0, 128
        %1638 = vxpose.xlu0.b32.cont [13/16] 0.0, 128
        %1639 = vxpose.xlu0.b32.cont [14/16] 0.0, 128
        %1640 = vxpose.xlu0.b32.cont [15/16] 0.0, 128
        %1641 = vxpose.xlu0.b32.end [16/16] 0.0, 128
        %v1642 = vpop.trf.xlu0
        %v1643 = vpop.trf.xlu0
        %v1644 = vpop.trf.xlu0
        %v1645 = vpop.trf.xlu0
        %v1646 = vpop.trf.xlu0
        %v1647 = vpop.trf.xlu0
        %v1648 = vpop.trf.xlu0
        %v1649 = vpop.trf.xlu0
        %v1650 = vpop.trf.xlu0
        %v1651 = vpop.trf.xlu0
        %v1652 = vpop.trf.xlu0
        %v1653 = vpop.trf.xlu0
        %v1654 = vpop.trf.xlu0
        %v1655 = vpop.trf.xlu0
        %v1656 = vpop.trf.xlu0
        %v1657 = vpop.trf.xlu0
        %v1659 = vsel %vm816, %v1642, 0
        %1661 = vmatpush.msra.mxu0 0.0
        %1662 = vmatpush.msra.mxu0 0.0
        %1663 = vmatpush.msra.mxu0 0.0
        %1664 = vmatpush.msra.mxu0 0.0
        %1665 = vmatpush.msra.mxu0 0.0
        %1666 = vmatpush.msra.mxu0 0.0
        %1667 = vmatpush.msra.mxu0 0.0
        %1668 = vmatpush.msra.mxu0 0.0
        %1669 = vmatpush.msra.mxu0 0.0
        %1670 = vmatpush.msra.mxu0 0.0
        %1671 = vmatpush.msra.mxu0 0.0
        %1672 = vmatpush.msra.mxu0 0.0
        %1673 = vmatpush.msra.mxu0 0.0
        %1674 = vmatpush.msra.mxu0 0.0
        %1675 = vmatpush.msra.mxu0 0.0
        %1676 = vmatpush.msra.mxu0 %v1599
        %1677 = vmatmul.f32.gmra.mxu0 %v1659
        %v1678 = vpop.f32.mrf.mxu0
        %v1679 = vadd.f32 %v602, %v1678
        %1680 = vdwg.mxu0
        %1681 = vxpose.xlu0.b32.start [1/16] %v1623, 128
        %1682 = vxpose.xlu0.b32.cont [2/16] 0.0, 128
        %1683 = vxpose.xlu0.b32.cont [3/16] 0.0, 128
        %1684 = vxpose.xlu0.b32.cont [4/16] 0.0, 128
        %1685 = vxpose.xlu0.b32.cont [5/16] 0.0, 128
        %1686 = vxpose.xlu0.b32.cont [6/16] 0.0, 128
        %1687 = vxpose.xlu0.b32.cont [7/16] 0.0, 128
        %1688 = vxpose.xlu0.b32.cont [8/16] 0.0, 128
        %1689 = vxpose.xlu0.b32.cont [9/16] 0.0, 128
        %1690 = vxpose.xlu0.b32.cont [10/16] 0.0, 128
        %1691 = vxpose.xlu0.b32.cont [11/16] 0.0, 128
        %1692 = vxpose.xlu0.b32.cont [12/16] 0.0, 128
        %1693 = vxpose.xlu0.b32.cont [13/16] 0.0, 128
        %1694 = vxpose.xlu0.b32.cont [14/16] 0.0, 128
        %1695 = vxpose.xlu0.b32.cont [15/16] 0.0, 128
        %1696 = vxpose.xlu0.b32.end [16/16] 0.0, 128
        %v1697 = vpop.trf.xlu0
        %v1698 = vpop.trf.xlu0
        %v1699 = vpop.trf.xlu0
        %v1700 = vpop.trf.xlu0
        %v1701 = vpop.trf.xlu0
        %v1702 = vpop.trf.xlu0
        %v1703 = vpop.trf.xlu0
        %v1704 = vpop.trf.xlu0
        %v1705 = vpop.trf.xlu0
        %v1706 = vpop.trf.xlu0
        %v1707 = vpop.trf.xlu0
        %v1708 = vpop.trf.xlu0
        %v1709 = vpop.trf.xlu0
        %v1710 = vpop.trf.xlu0
        %v1711 = vpop.trf.xlu0
        %v1712 = vpop.trf.xlu0
        %v1714 = vsel %vm816, %v1697, 0
        %1716 = vmatpush.msra.mxu0 0.0
        %1717 = vmatpush.msra.mxu0 0.0
        %1718 = vmatpush.msra.mxu0 0.0
        %1719 = vmatpush.msra.mxu0 0.0
        %1720 = vmatpush.msra.mxu0 0.0
        %1721 = vmatpush.msra.mxu0 0.0
        %1722 = vmatpush.msra.mxu0 0.0
        %1723 = vmatpush.msra.mxu0 0.0
        %1724 = vmatpush.msra.mxu0 0.0
        %1725 = vmatpush.msra.mxu0 0.0
        %1726 = vmatpush.msra.mxu0 0.0
        %1727 = vmatpush.msra.mxu0 0.0
        %1728 = vmatpush.msra.mxu0 0.0
        %1729 = vmatpush.msra.mxu0 0.0
        %1730 = vmatpush.msra.mxu0 0.0
        %1731 = vmatpush.msra.mxu0 %v1602
        %1732 = vmatmul.f32.gmra.mxu0 %v1714
        %v1733 = vpop.f32.mrf.mxu0
        %v1734 = vadd.f32 %v602, %v1733
        %1735 = vdwg.mxu0
        %1736 = vxpose.xlu0.b32.start [1/16] %v1624, 128
        %1737 = vxpose.xlu0.b32.cont [2/16] 0.0, 128
        %1738 = vxpose.xlu0.b32.cont [3/16] 0.0, 128
        %1739 = vxpose.xlu0.b32.cont [4/16] 0.0, 128
        %1740 = vxpose.xlu0.b32.cont [5/16] 0.0, 128
        %1741 = vxpose.xlu0.b32.cont [6/16] 0.0, 128
        %1742 = vxpose.xlu0.b32.cont [7/16] 0.0, 128
        %1743 = vxpose.xlu0.b32.cont [8/16] 0.0, 128
        %1744 = vxpose.xlu0.b32.cont [9/16] 0.0, 128
        %1745 = vxpose.xlu0.b32.cont [10/16] 0.0, 128
        %1746 = vxpose.xlu0.b32.cont [11/16] 0.0, 128
        %1747 = vxpose.xlu0.b32.cont [12/16] 0.0, 128
        %1748 = vxpose.xlu0.b32.cont [13/16] 0.0, 128
        %1749 = vxpose.xlu0.b32.cont [14/16] 0.0, 128
        %1750 = vxpose.xlu0.b32.cont [15/16] 0.0, 128
        %1751 = vxpose.xlu0.b32.end [16/16] 0.0, 128
        %v1752 = vpop.trf.xlu0
        %v1753 = vpop.trf.xlu0
        %v1754 = vpop.trf.xlu0
        %v1755 = vpop.trf.xlu0
        %v1756 = vpop.trf.xlu0
        %v1757 = vpop.trf.xlu0
        %v1758 = vpop.trf.xlu0
        %v1759 = vpop.trf.xlu0
        %v1760 = vpop.trf.xlu0
        %v1761 = vpop.trf.xlu0
        %v1762 = vpop.trf.xlu0
        %v1763 = vpop.trf.xlu0
        %v1764 = vpop.trf.xlu0
        %v1765 = vpop.trf.xlu0
        %v1766 = vpop.trf.xlu0
        %v1767 = vpop.trf.xlu0
        %v1769 = vsel %vm816, %v1752, 0
        %1771 = vmatpush.msra.mxu0 0.0
        %1772 = vmatpush.msra.mxu0 0.0
        %1773 = vmatpush.msra.mxu0 0.0
        %1774 = vmatpush.msra.mxu0 0.0
        %1775 = vmatpush.msra.mxu0 0.0
        %1776 = vmatpush.msra.mxu0 0.0
        %1777 = vmatpush.msra.mxu0 0.0
        %1778 = vmatpush.msra.mxu0 0.0
        %1779 = vmatpush.msra.mxu0 0.0
        %1780 = vmatpush.msra.mxu0 0.0
        %1781 = vmatpush.msra.mxu0 0.0
        %1782 = vmatpush.msra.mxu0 0.0
        %1783 = vmatpush.msra.mxu0 0.0
        %1784 = vmatpush.msra.mxu0 0.0
        %1785 = vmatpush.msra.mxu0 0.0
        %1786 = vmatpush.msra.mxu0 %v1605
        %1787 = vmatmul.f32.gmra.mxu0 %v1769
        %v1788 = vpop.f32.mrf.mxu0
        %v1789 = vadd.f32 %v602, %v1788
        %1790 = vdwg.mxu0
        %1791 = vxpose.xlu0.b32.start [1/16] %v1625, 128
        %1792 = vxpose.xlu0.b32.cont [2/16] 0.0, 128
        %1793 = vxpose.xlu0.b32.cont [3/16] 0.0, 128
        %1794 = vxpose.xlu0.b32.cont [4/16] 0.0, 128
        %1795 = vxpose.xlu0.b32.cont [5/16] 0.0, 128
        %1796 = vxpose.xlu0.b32.cont [6/16] 0.0, 128
        %1797 = vxpose.xlu0.b32.cont [7/16] 0.0, 128
        %1798 = vxpose.xlu0.b32.cont [8/16] 0.0, 128
        %1799 = vxpose.xlu0.b32.cont [9/16] 0.0, 128
        %1800 = vxpose.xlu0.b32.cont [10/16] 0.0, 128
        %1801 = vxpose.xlu0.b32.cont [11/16] 0.0, 128
        %1802 = vxpose.xlu0.b32.cont [12/16] 0.0, 128
        %1803 = vxpose.xlu0.b32.cont [13/16] 0.0, 128
        %1804 = vxpose.xlu0.b32.cont [14/16] 0.0, 128
        %1805 = vxpose.xlu0.b32.cont [15/16] 0.0, 128
        %1806 = vxpose.xlu0.b32.end [16/16] 0.0, 128
        %v1807 = vpop.trf.xlu0
        %v1808 = vpop.trf.xlu0
        %v1809 = vpop.trf.xlu0
        %v1810 = vpop.trf.xlu0
        %v1811 = vpop.trf.xlu0
        %v1812 = vpop.trf.xlu0
        %v1813 = vpop.trf.xlu0
        %v1814 = vpop.trf.xlu0
        %v1815 = vpop.trf.xlu0
        %v1816 = vpop.trf.xlu0
        %v1817 = vpop.trf.xlu0
        %v1818 = vpop.trf.xlu0
        %v1819 = vpop.trf.xlu0
        %v1820 = vpop.trf.xlu0
        %v1821 = vpop.trf.xlu0
        %v1822 = vpop.trf.xlu0
        %v1824 = vsel %vm816, %v1807, 0
        %1826 = vmatpush.msra.mxu0 0.0
        %1827 = vmatpush.msra.mxu0 0.0
        %1828 = vmatpush.msra.mxu0 0.0
        %1829 = vmatpush.msra.mxu0 0.0
        %1830 = vmatpush.msra.mxu0 0.0
        %1831 = vmatpush.msra.mxu0 0.0
        %1832 = vmatpush.msra.mxu0 0.0
        %1833 = vmatpush.msra.mxu0 0.0
        %1834 = vmatpush.msra.mxu0 0.0
        %1835 = vmatpush.msra.mxu0 0.0
        %1836 = vmatpush.msra.mxu0 0.0
        %1837 = vmatpush.msra.mxu0 0.0
        %1838 = vmatpush.msra.mxu0 0.0
        %1839 = vmatpush.msra.mxu0 0.0
        %1840 = vmatpush.msra.mxu0 0.0
        %1841 = vmatpush.msra.mxu0 %v1608
        %1842 = vmatmul.f32.gmra.mxu0 %v1824
        %v1843 = vpop.f32.mrf.mxu0
        %v1844 = vadd.f32 %v602, %v1843
        %1845 = vdwg.mxu0
        %v1846 = vsel %vm816, %v1679, -inf
        %1847 = vmax.xlane.f32.xlu0 %v1846
        %v1848 = vpop.xlane.xlu0 %1847
        %v1849 = vsel %vm816, %v1734, -inf
        %1850 = vmax.xlane.f32.xlu0 %v1849
        %v1851 = vpop.xlane.xlu0 %1850
        %v1852 = vsel %vm816, %v1789, -inf
        %1853 = vmax.xlane.f32.xlu0 %v1852
        %v1854 = vpop.xlane.xlu0 %1853
        %v1855 = vsel %vm816, %v1844, -inf
        %1856 = vmax.xlane.f32.xlu0 %v1855
        %v1857 = vpop.xlane.xlu0 %1856
        %v1858 = vsub.f32 %v1679, %v1848
        %v1859 = vsub.f32 %v1734, %v1851
        %v1860 = vsub.f32 %v1789, %v1854
        %v1861 = vsub.f32 %v1844, %v1857
        %v1862 = vmul.f32 %v1858, 1.442695
        %v1863 = vpow.pop %v1862
        %v1864 = vmul.f32 %v1859, 1.442695
        %v1865 = vpow.pop %v1864
        %v1866 = vmul.f32 %v1860, 1.442695
        %v1867 = vpow.pop %v1866
        %v1868 = vmul.f32 %v1861, 1.442695
        %v1869 = vpow.pop %v1868
        %v1871 = vsel %vm816, %v1863, 0
        %1873 = vmatpush.xpose.msra.mxu0 0.0
        %1874 = vmatpush.xpose.msra.mxu0 0.0
        %1875 = vmatpush.xpose.msra.mxu0 0.0
        %1876 = vmatpush.xpose.msra.mxu0 0.0
        %1877 = vmatpush.xpose.msra.mxu0 0.0
        %1878 = vmatpush.xpose.msra.mxu0 0.0
        %1879 = vmatpush.xpose.msra.mxu0 0.0
        %1880 = vmatpush.xpose.msra.mxu0 0.0
        %1881 = vmatpush.xpose.msra.mxu0 0.0
        %1882 = vmatpush.xpose.msra.mxu0 0.0
        %1883 = vmatpush.xpose.msra.mxu0 0.0
        %1884 = vmatpush.xpose.msra.mxu0 0.0
        %1885 = vmatpush.xpose.msra.mxu0 0.0
        %1886 = vmatpush.xpose.msra.mxu0 0.0
        %1887 = vmatpush.xpose.msra.mxu0 0.0
        %1888 = vmatpush.xpose.msra.mxu0 %v1871
        %1889 = vmatmul.f32.gmra.mxu0 %v1030
        %v1890 = vpop.f32.mrf.mxu0
        %v1891 = vadd.f32 0.0, %v1890
        %1892 = vdwg.mxu0
        %v1894 = vsel %vm816, %v1865, 0
        %1896 = vmatpush.xpose.msra.mxu0 0.0
        %1897 = vmatpush.xpose.msra.mxu0 0.0
        %1898 = vmatpush.xpose.msra.mxu0 0.0
        %1899 = vmatpush.xpose.msra.mxu0 0.0
        %1900 = vmatpush.xpose.msra.mxu0 0.0
        %1901 = vmatpush.xpose.msra.mxu0 0.0
        %1902 = vmatpush.xpose.msra.mxu0 0.0
        %1903 = vmatpush.xpose.msra.mxu0 0.0
        %1904 = vmatpush.xpose.msra.mxu0 0.0
        %1905 = vmatpush.xpose.msra.mxu0 0.0
        %1906 = vmatpush.xpose.msra.mxu0 0.0
        %1907 = vmatpush.xpose.msra.mxu0 0.0
        %1908 = vmatpush.xpose.msra.mxu0 0.0
        %1909 = vmatpush.xpose.msra.mxu0 0.0
        %1910 = vmatpush.xpose.msra.mxu0 0.0
        %1911 = vmatpush.xpose.msra.mxu0 %v1894
        %1912 = vmatmul.f32.gmra.mxu0 %v1030
        %v1913 = vpop.f32.mrf.mxu0
        %v1914 = vadd.f32 0.0, %v1913
        %1915 = vdwg.mxu0
        %v1917 = vsel %vm816, %v1867, 0
        %1919 = vmatpush.xpose.msra.mxu0 0.0
        %1920 = vmatpush.xpose.msra.mxu0 0.0
        %1921 = vmatpush.xpose.msra.mxu0 0.0
        %1922 = vmatpush.xpose.msra.mxu0 0.0
        %1923 = vmatpush.xpose.msra.mxu0 0.0
        %1924 = vmatpush.xpose.msra.mxu0 0.0
        %1925 = vmatpush.xpose.msra.mxu0 0.0
        %1926 = vmatpush.xpose.msra.mxu0 0.0
        %1927 = vmatpush.xpose.msra.mxu0 0.0
        %1928 = vmatpush.xpose.msra.mxu0 0.0
        %1929 = vmatpush.xpose.msra.mxu0 0.0
        %1930 = vmatpush.xpose.msra.mxu0 0.0
        %1931 = vmatpush.xpose.msra.mxu0 0.0
        %1932 = vmatpush.xpose.msra.mxu0 0.0
        %1933 = vmatpush.xpose.msra.mxu0 0.0
        %1934 = vmatpush.xpose.msra.mxu0 %v1917
        %1935 = vmatmul.f32.gmra.mxu0 %v1030
        %v1936 = vpop.f32.mrf.mxu0
        %v1937 = vadd.f32 0.0, %v1936
        %1938 = vdwg.mxu0
        %v1940 = vsel %vm816, %v1869, 0
        %1942 = vmatpush.xpose.msra.mxu0 0.0
        %1943 = vmatpush.xpose.msra.mxu0 0.0
        %1944 = vmatpush.xpose.msra.mxu0 0.0
        %1945 = vmatpush.xpose.msra.mxu0 0.0
        %1946 = vmatpush.xpose.msra.mxu0 0.0
        %1947 = vmatpush.xpose.msra.mxu0 0.0
        %1948 = vmatpush.xpose.msra.mxu0 0.0
        %1949 = vmatpush.xpose.msra.mxu0 0.0
        %1950 = vmatpush.xpose.msra.mxu0 0.0
        %1951 = vmatpush.xpose.msra.mxu0 0.0
        %1952 = vmatpush.xpose.msra.mxu0 0.0
        %1953 = vmatpush.xpose.msra.mxu0 0.0
        %1954 = vmatpush.xpose.msra.mxu0 0.0
        %1955 = vmatpush.xpose.msra.mxu0 0.0
        %1956 = vmatpush.xpose.msra.mxu0 0.0
        %1957 = vmatpush.xpose.msra.mxu0 %v1940
        %1958 = vmatmul.f32.gmra.mxu0 %v1030
        %v1959 = vpop.f32.mrf.mxu0
        %v1960 = vadd.f32 0.0, %v1959
        %1961 = vdwg.mxu0
        %v1963 = vsel %vm816, %v1611, 0
        %1965 = vmatpush.xpose.msra.mxu0 0.0
        %1966 = vmatpush.xpose.msra.mxu0 0.0
        %1967 = vmatpush.xpose.msra.mxu0 0.0
        %1968 = vmatpush.xpose.msra.mxu0 0.0
        %1969 = vmatpush.xpose.msra.mxu0 0.0
        %1970 = vmatpush.xpose.msra.mxu0 0.0
        %1971 = vmatpush.xpose.msra.mxu0 0.0
        %1972 = vmatpush.xpose.msra.mxu0 0.0
        %1973 = vmatpush.xpose.msra.mxu0 0.0
        %1974 = vmatpush.xpose.msra.mxu0 0.0
        %1975 = vmatpush.xpose.msra.mxu0 0.0
        %1976 = vmatpush.xpose.msra.mxu0 0.0
        %1977 = vmatpush.xpose.msra.mxu0 0.0
        %1978 = vmatpush.xpose.msra.mxu0 0.0
        %1979 = vmatpush.xpose.msra.mxu0 0.0
        %1980 = vmatpush.xpose.msra.mxu0 %v1871
        %1981 = vmatmul.f32.gmra.mxu0 %v1963
        %v1982 = vpop.f32.mrf.mxu0
        %v1983 = vadd.f32 0.0, %v1982
        %1984 = vdwg.mxu0
        %v1986 = vsel %vm816, %v1614, 0
        %1988 = vmatpush.xpose.msra.mxu0 0.0
        %1989 = vmatpush.xpose.msra.mxu0 0.0
        %1990 = vmatpush.xpose.msra.mxu0 0.0
        %1991 = vmatpush.xpose.msra.mxu0 0.0
        %1992 = vmatpush.xpose.msra.mxu0 0.0
        %1993 = vmatpush.xpose.msra.mxu0 0.0
        %1994 = vmatpush.xpose.msra.mxu0 0.0
        %1995 = vmatpush.xpose.msra.mxu0 0.0
        %1996 = vmatpush.xpose.msra.mxu0 0.0
        %1997 = vmatpush.xpose.msra.mxu0 0.0
        %1998 = vmatpush.xpose.msra.mxu0 0.0
        %1999 = vmatpush.xpose.msra.mxu0 0.0
        %2000 = vmatpush.xpose.msra.mxu0 0.0
        %2001 = vmatpush.xpose.msra.mxu0 0.0
        %2002 = vmatpush.xpose.msra.mxu0 0.0
        %2003 = vmatpush.xpose.msra.mxu0 %v1894
        %2004 = vmatmul.f32.gmra.mxu0 %v1986
        %v2005 = vpop.f32.mrf.mxu0
        %v2006 = vadd.f32 0.0, %v2005
        %2007 = vdwg.mxu0
        %v2009 = vsel %vm816, %v1617, 0
        %2011 = vmatpush.xpose.msra.mxu0 0.0
        %2012 = vmatpush.xpose.msra.mxu0 0.0
        %2013 = vmatpush.xpose.msra.mxu0 0.0
        %2014 = vmatpush.xpose.msra.mxu0 0.0
        %2015 = vmatpush.xpose.msra.mxu0 0.0
        %2016 = vmatpush.xpose.msra.mxu0 0.0
        %2017 = vmatpush.xpose.msra.mxu0 0.0
        %2018 = vmatpush.xpose.msra.mxu0 0.0
        %2019 = vmatpush.xpose.msra.mxu0 0.0
        %2020 = vmatpush.xpose.msra.mxu0 0.0
        %2021 = vmatpush.xpose.msra.mxu0 0.0
        %2022 = vmatpush.xpose.msra.mxu0 0.0
        %2023 = vmatpush.xpose.msra.mxu0 0.0
        %2024 = vmatpush.xpose.msra.mxu0 0.0
        %2025 = vmatpush.xpose.msra.mxu0 0.0
        %2026 = vmatpush.xpose.msra.mxu0 %v1917
        %2027 = vmatmul.f32.gmra.mxu0 %v2009
        %v2028 = vpop.f32.mrf.mxu0
        %v2029 = vadd.f32 0.0, %v2028
        %2030 = vdwg.mxu0
        %v2032 = vsel %vm816, %v1620, 0
        %2034 = vmatpush.xpose.msra.mxu0 0.0
        %2035 = vmatpush.xpose.msra.mxu0 0.0
        %2036 = vmatpush.xpose.msra.mxu0 0.0
        %2037 = vmatpush.xpose.msra.mxu0 0.0
        %2038 = vmatpush.xpose.msra.mxu0 0.0
        %2039 = vmatpush.xpose.msra.mxu0 0.0
        %2040 = vmatpush.xpose.msra.mxu0 0.0
        %2041 = vmatpush.xpose.msra.mxu0 0.0
        %2042 = vmatpush.xpose.msra.mxu0 0.0
        %2043 = vmatpush.xpose.msra.mxu0 0.0
        %2044 = vmatpush.xpose.msra.mxu0 0.0
        %2045 = vmatpush.xpose.msra.mxu0 0.0
        %2046 = vmatpush.xpose.msra.mxu0 0.0
        %2047 = vmatpush.xpose.msra.mxu0 0.0
        %2048 = vmatpush.xpose.msra.mxu0 0.0
        %2049 = vmatpush.xpose.msra.mxu0 %v1940
        %2050 = vmatmul.f32.gmra.mxu0 %v2032
        %v2051 = vpop.f32.mrf.mxu0
        %v2052 = vadd.f32 0.0, %v2051
        %2053 = vdwg.mxu0
        %v2054 = vrcp.pop %v1891
        %v2055 = vrcp.pop %v1914
        %v2056 = vrcp.pop %v1937
        %v2057 = vrcp.pop %v1960
        %v2058 = vperm.slane %v2054, 0
        %v2059 = vperm.slane %v2055, 0
        %v2060 = vperm.slane %v2056, 0
        %v2061 = vperm.slane %v2057, 0
        %v2062 = vmul.f32 %v1983, %v2058
        %v2063 = vmul.f32 %v2006, %v2059
        %v2064 = vmul.f32 %v2029, %v2060
        %v2065 = vmul.f32 %v2052, %v2061
        %s2066 = scalar_lea.vmem %s6, 32
        %v2067 = vld [vmem:[%s2066] sm:$0xff]
        %v2068 = vld [vmem:[%s2066 + $0x8] sm:$0xff]
        %v2069 = vld [vmem:[%s2066 + $0x10] sm:$0xff]
        %v2070 = vld [vmem:[%s2066 + $0x18] sm:$0xff]
        %s2071 = scalar_lea.vmem %s7, 1
        %v2072 = vld [vmem:[%s2071] sm:$0x1]
        %v2074 = vperm.slane %v2072, 0
        %2076 = vxpose.xlu0.b32.start [1/16] %v2062, 128
        %2077 = vxpose.xlu0.b32.cont [2/16] %v2063, 128
        %2078 = vxpose.xlu0.b32.cont [3/16] %v2064, 128
        %2079 = vxpose.xlu0.b32.cont [4/16] %v2065, 128
        %2080 = vxpose.xlu0.b32.cont [5/16] 0.0, 128
        %2081 = vxpose.xlu0.b32.cont [6/16] 0.0, 128
        %2082 = vxpose.xlu0.b32.cont [7/16] 0.0, 128
        %2083 = vxpose.xlu0.b32.cont [8/16] 0.0, 128
        %2084 = vxpose.xlu0.b32.cont [9/16] 0.0, 128
        %2085 = vxpose.xlu0.b32.cont [10/16] 0.0, 128
        %2086 = vxpose.xlu0.b32.cont [11/16] 0.0, 128
        %2087 = vxpose.xlu0.b32.cont [12/16] 0.0, 128
        %2088 = vxpose.xlu0.b32.cont [13/16] 0.0, 128
        %2089 = vxpose.xlu0.b32.cont [14/16] 0.0, 128
        %2090 = vxpose.xlu0.b32.cont [15/16] 0.0, 128
        %2091 = vxpose.xlu0.b32.end [16/16] 0.0, 128
        %v2092 = vpop.trf.xlu0
        %v2093 = vpop.trf.xlu0
        %v2094 = vpop.trf.xlu0
        %v2095 = vpop.trf.xlu0
        %v2096 = vpop.trf.xlu0
        %v2097 = vpop.trf.xlu0
        %v2098 = vpop.trf.xlu0
        %v2099 = vpop.trf.xlu0
        %v2100 = vpop.trf.xlu0
        %v2101 = vpop.trf.xlu0
        %v2102 = vpop.trf.xlu0
        %v2103 = vpop.trf.xlu0
        %v2104 = vpop.trf.xlu0
        %v2105 = vpop.trf.xlu0
        %v2106 = vpop.trf.xlu0
        %v2107 = vpop.trf.xlu0
        %v2109 = vsel %vm687, %v2092, 0
        %2111 = vmatpush.msra.mxu0 0.0
        %2112 = vmatpush.msra.mxu0 0.0
        %2113 = vmatpush.msra.mxu0 0.0
        %2114 = vmatpush.msra.mxu0 0.0
        %2115 = vmatpush.msra.mxu0 0.0
        %2116 = vmatpush.msra.mxu0 0.0
        %2117 = vmatpush.msra.mxu0 0.0
        %2118 = vmatpush.msra.mxu0 0.0
        %2119 = vmatpush.msra.mxu0 0.0
        %2120 = vmatpush.msra.mxu0 0.0
        %2121 = vmatpush.msra.mxu0 0.0
        %2122 = vmatpush.msra.mxu0 0.0
        %2123 = vmatpush.msra.mxu0 %v2070
        %2124 = vmatpush.msra.mxu0 %v2069
        %2125 = vmatpush.msra.mxu0 %v2068
        %2126 = vmatpush.msra.mxu0 %v2067
        %2127 = vmatmul.f32.gmra.mxu0 %v2109
        %v2128 = vpop.f32.mrf.mxu0
        %v2129 = vadd.f32 %v2074, %v2128
        %2130 = vdwg.mxu0
        %v2131 = vadd.f32 %v1443, %v2129
        %s2132 = scalar_lea.vmem %s8, 1
        %v2133 = vld [vmem:[%s2132] sm:$0x1]
        %s2134 = scalar_lea.vmem %s9, 1
        %v2135 = vld [vmem:[%s2134] sm:$0x1]
        %v2136 = vsel %vm687, %v2131, 0.0
        %2137 = vadd.xlane.f32.xlu0 %v2136
        %v2138 = vpop.xlane.xlu0 %2137
        %v2139 = vmul.f32 %v2138, %v1303
        %v2140 = vsub.f32 %v2131, %v2139
        %v2141 = vmul.f32 %v2140, %v2140
        %v2142 = vsel %vm687, %v2141, 0.0
        %2143 = vadd.xlane.f32.xlu0 %v2142
        %v2144 = vpop.xlane.xlu0 %2143
        %v2145 = vmul.f32 %v2144, %v1303
        %v2146 = vadd.f32 %v2145, 1e-05
        %v2147 = vrsqrt.pop %v2146
        %v2148 = vmul.f32 %v2147, %v2146
        %v2149 = vmul.f32 %v2148, %v2147
        %v2150 = vmul.f32 0.5, %v2149
        %v2151 = vsub.f32 1.5, %v2150
        %v2152 = vmul.f32 %v2147, %v2151
        %vm2153 = vweird.f32 %v2146
        %vm2154 = vweird.f32 %v2147
        %vm2155 = vmor %vm2153, %vm2154
        %v2156 = vsel %vm2155, %v2147, %v2152
        %v2157 = vmul.f32 %v2140, %v2156
        %v2159 = vperm.slane %v2133, 0
        %v2161 = vmul.f32 %v2157, %v2159
        %v2163 = vperm.slane %v2135, 0
        %v2165 = vadd.f32 %v2161, %v2163
        %s2166 = scalar_lea.vmem %s10, 32
        %v2167 = vld [vmem:[%s2166] sm:$0xff]
        %v2168 = vld [vmem:[%s2166 + $0x8] sm:$0xff]
        %v2169 = vld [vmem:[%s2166 + $0x10] sm:$0xff]
        %v2170 = vld [vmem:[%s2166 + $0x18] sm:$0xff]
        %s2171 = scalar_lea.vmem %s11, 1
        %v2172 = vld [vmem:[%s2171] sm:$0x1]
        %v2174 = vperm.slane %v2172, 0
        %v2177 = vsel %vm687, %v2165, 0
        %2179 = vmatpush.msra.mxu0 0.0
        %2180 = vmatpush.msra.mxu0 0.0
        %2181 = vmatpush.msra.mxu0 0.0
        %2182 = vmatpush.msra.mxu0 0.0
        %2183 = vmatpush.msra.mxu0 0.0
        %2184 = vmatpush.msra.mxu0 0.0
        %2185 = vmatpush.msra.mxu0 0.0
        %2186 = vmatpush.msra.mxu0 0.0
        %2187 = vmatpush.msra.mxu0 0.0
        %2188 = vmatpush.msra.mxu0 0.0
        %2189 = vmatpush.msra.mxu0 0.0
        %2190 = vmatpush.msra.mxu0 0.0
        %2191 = vmatpush.msra.mxu0 %v2170
        %2192 = vmatpush.msra.mxu0 %v2169
        %2193 = vmatpush.msra.mxu0 %v2168
        %2194 = vmatpush.msra.mxu0 %v2167
        %2195 = vmatmul.f32.gmra.mxu0 %v2177
        %v2196 = vpop.f32.mrf.mxu0
        %v2197 = vadd.f32 %v2174, %v2196
        %2198 = vdwg.mxu0
        %v2199 = vmul.f32 %v2197, 0.5
        %v2200 = vmul.f32 %v2197, %v2197
        %v2201 = vmul.f32 %v2197, %v2200
        %v2202 = vmul.f32 %v2201, 0.044715
        %v2203 = vadd.f32 %v2197, %v2202
        %v2204 = vmul.f32 %v2203, 0.7978846
        %v2205 = vtanh.pop %v2204
        %v2206 = vadd.f32 %v2205, 1.0
        %v2207 = vmul.f32 %v2199, %v2206
        %s2208 = scalar_lea.vmem %s12, 128
        %v2209 = vld [vmem:[%s2208] sm:$0xff]
        %v2210 = vld [vmem:[%s2208 + $0x8] sm:$0xff]
        %v2211 = vld [vmem:[%s2208 + $0x10] sm:$0xff]
        %v2212 = vld [vmem:[%s2208 + $0x18] sm:$0xff]
        %v2213 = vld [vmem:[%s2208 + $0x20] sm:$0xff]
        %v2214 = vld [vmem:[%s2208 + $0x28] sm:$0xff]
        %v2215 = vld [vmem:[%s2208 + $0x30] sm:$0xff]
        %v2216 = vld [vmem:[%s2208 + $0x38] sm:$0xff]
        %v2217 = vld [vmem:[%s2208 + $0x40] sm:$0xff]
        %v2218 = vld [vmem:[%s2208 + $0x48] sm:$0xff]
        %v2219 = vld [vmem:[%s2208 + $0x50] sm:$0xff]
        %v2220 = vld [vmem:[%s2208 + $0x58] sm:$0xff]
        %v2221 = vld [vmem:[%s2208 + $0x60] sm:$0xff]
        %v2222 = vld [vmem:[%s2208 + $0x68] sm:$0xff]
        %v2223 = vld [vmem:[%s2208 + $0x70] sm:$0xff]
        %v2224 = vld [vmem:[%s2208 + $0x78] sm:$0xff]
        %s2225 = scalar_lea.vmem %s13, 1
        %v2226 = vld [vmem:[%s2225] sm:$0x1]
        %v2228 = vperm.slane %v2226, 0
        %2230 = vmatpush.msra.mxu0 %v2224
        %2231 = vmatpush.msra.mxu0 %v2223
        %2232 = vmatpush.msra.mxu0 %v2222
        %2233 = vmatpush.msra.mxu0 %v2221
        %2234 = vmatpush.msra.mxu0 %v2220
        %2235 = vmatpush.msra.mxu0 %v2219
        %2236 = vmatpush.msra.mxu0 %v2218
        %2237 = vmatpush.msra.mxu0 %v2217
        %2238 = vmatpush.msra.mxu0 %v2216
        %2239 = vmatpush.msra.mxu0 %v2215
        %2240 = vmatpush.msra.mxu0 %v2214
        %2241 = vmatpush.msra.mxu0 %v2213
        %2242 = vmatpush.msra.mxu0 %v2212
        %2243 = vmatpush.msra.mxu0 %v2211
        %2244 = vmatpush.msra.mxu0 %v2210
        %2245 = vmatpush.msra.mxu0 %v2209
        %2246 = vmatmul.f32.gmra.mxu0 %v2207
        %v2247 = vpop.f32.mrf.mxu0
        %v2248 = vadd.f32 %v2228, %v2247
        %2249 = vdwg.mxu0
        %v2250 = vadd.f32 %v2248, %v2165
        %s2251 = scalar_lea.vmem %s14, 1
        %v2252 = vld [vmem:[%s2251] sm:$0x1]
        %s2253 = scalar_lea.vmem %s15, 1
        %v2254 = vld [vmem:[%s2253] sm:$0x1]
        %v2255 = vsel %vm687, %v2250, 0.0
        %2256 = vadd.xlane.f32.xlu0 %v2255
        %v2257 = vpop.xlane.xlu0 %2256
        %v2258 = vmul.f32 %v2257, %v1303
        %v2259 = vsub.f32 %v2250, %v2258
        %v2260 = vmul.f32 %v2259, %v2259
        %v2261 = vsel %vm687, %v2260, 0.0
        %2262 = vadd.xlane.f32.xlu0 %v2261
        %v2263 = vpop.xlane.xlu0 %2262
        %v2264 = vmul.f32 %v2263, %v1303
        %v2265 = vadd.f32 %v2264, 1e-05
        %v2266 = vrsqrt.pop %v2265
        %v2267 = vmul.f32 %v2266, %v2265
        %v2268 = vmul.f32 %v2267, %v2266
        %v2269 = vmul.f32 0.5, %v2268
        %v2270 = vsub.f32 1.5, %v2269
        %v2271 = vmul.f32 %v2266, %v2270
        %vm2272 = vweird.f32 %v2265
        %vm2273 = vweird.f32 %v2266
        %vm2274 = vmor %vm2272, %vm2273
        %v2275 = vsel %vm2274, %v2266, %v2271
        %v2276 = vmul.f32 %v2259, %v2275
        %v2278 = vperm.slane %v2252, 0
        %v2280 = vmul.f32 %v2276, %v2278
        %v2282 = vperm.slane %v2254, 0
        %v2284 = vadd.f32 %v2280, %v2282
        %v2285 = vld [vmem:[%s16] sm:$0xff]
        %v2286 = vld [vmem:[%s16 + $0x8] sm:$0xff]
        %v2287 = vld [vmem:[%s16 + $0x10] sm:$0xff]
        %v2288 = vld [vmem:[%s16 + $0x18] sm:$0xff]
        %v2289 = vld [vmem:[%s17] sm:$0x1]
        %v2291 = vperm.slane %v2289, 0
        %v2294 = vsel %vm687, %v2284, 0
        %2296 = vmatpush.msra.mxu0 0.0
        %2297 = vmatpush.msra.mxu0 0.0
        %2298 = vmatpush.msra.mxu0 0.0
        %2299 = vmatpush.msra.mxu0 0.0
        %2300 = vmatpush.msra.mxu0 0.0
        %2301 = vmatpush.msra.mxu0 0.0
        %2302 = vmatpush.msra.mxu0 0.0
        %2303 = vmatpush.msra.mxu0 0.0
        %2304 = vmatpush.msra.mxu0 0.0
        %2305 = vmatpush.msra.mxu0 0.0
        %2306 = vmatpush.msra.mxu0 0.0
        %2307 = vmatpush.msra.mxu0 0.0
        %2308 = vmatpush.msra.mxu0 %v2288
        %2309 = vmatpush.msra.mxu0 %v2287
        %2310 = vmatpush.msra.mxu0 %v2286
        %2311 = vmatpush.msra.mxu0 %v2285
        %2312 = vmatmul.f32.gmra.mxu0 %v2294
        %v2313 = vpop.f32.mrf.mxu0
        %v2314 = vadd.f32 %v2291, %v2313
        %2315 = vdwg.mxu0
        %2316 = vst [vmem:[%s566] sm:$0xff] %v2314
        %s2317 = sand.u32 %s423, 1
        %s2318 = scalar_lea.sflag [#allocation3], %s2317
        %s2319 = sand.u32 %s423, 1
        %s2320 = smul.addr %s2319, 8
        %s2321 = scalar_lea.vmem [#allocation2], %s2320
        // Predicated region
        $region93: #{tpu_custom_call.1} parent=91 // pred_check
          %p2322 = pneg %p433
        $region94: #{tpu_custom_call.1} parent=91 // pred_check_branch
          %2324 = sbr.rel (%p2322) target = $region96
        $region95: #{tpu_custom_call.1} parent=91 // pred_region
          %2326 = vsyncadd %s2318, 0
          %s2327 = smul.addr %s32, 8
          %s2328 = scalar_lea.hbm %s18, %s2327
          %s2330 = sshll.u32 %s2321, 4
          %s2331 = int_to_ptr.vmem [resolvable:$true] %s2330
          %s2332 = sshll.u32 %s2328, 4
          %s2333 = int_to_ptr.hbm [resolvable:$true] %s2332
          %2335 = dma.vmem_to_hbm [thread:$0]  %s2331, 128, %s2333, %s2318
        $region96: #{tpu_custom_call.1} parent=91 // pred_fallthru
          _
      $region92: #{tpu_custom_call.1} parent=5 // pred_fallthru
        _
      %p2336 = scmp.le.s32.totalorder 2, %s27
      // Predicated region
      $region97: #{tpu_custom_call.1} parent=5 // pred_check
        %p2337 = pneg %p2336
      $region98: #{tpu_custom_call.1} parent=5 // pred_check_branch
        %2339 = sbr.rel (%p2337) target = $region100
      $region99: #{tpu_custom_call.1} parent=5 // pred_region
        %s2340 = ssub.s32 %s27, 2
        // Predicated region
        $region101: #{tpu_custom_call.1} parent=99 // pred_check
          %p2341 = pneg %p439
        $region102: #{tpu_custom_call.1} parent=99 // pred_check_branch
          %2343 = sbr.rel (%p2341) target = $region104
        $region103: #{tpu_custom_call.1} parent=99 // pred_region
          %s2344 = sand.u32 %s424, 1
          %s2345 = scalar_lea.sflag [#allocation3], %s2344
          %s2346 = sand.u32 %s424, 1
          %s2347 = smul.addr %s2346, 8
          %s2348 = scalar_lea.vmem [#allocation2], %s2347
          %2350 = dma.done %s2345, 128
        $region104: #{tpu_custom_call.1} parent=99 // pred_fallthru
          _
      $region100: #{tpu_custom_call.1} parent=5 // pred_fallthru
        _
    $region6: #{tpu_custom_call.1} parent=1 // loop_footer
      %s31 = sadd.s32 1, %s27
    $region7: #{tpu_custom_call.1} parent=1 // loop_footer_branch
      %26 = sbr.rel target = $region3
    $region8: #{tpu_custom_call.1} parent=1 // loop_exit
      _
    %2351 = vsyncpa [#allocation3], 1
    %s2352 = scalar_lea.sflag [#allocation3], 1
    %2353 = vsyncpa %s2352, 1

</llo_original>
